<compile_context>
chip_gen: v7x
topology: tpu7x:2x2x1
jax: 0.10.0
libtpu: 0.0.40
codegen_flags: <defaults>
</compile_context>

<pallas_src>
import functools
import math

import jax
import jax.numpy as jnp
import numpy as np
from jax import lax
from jax.experimental import pallas as pl
from jax.experimental.pallas import tpu as pltpu

BF16 = jnp.bfloat16
F32 = jnp.float32

# contract dim 0 of both operands: (K, M) . (K, N) -> (M, N)
TRANS_A = (((0,), (0,)), ((), ()))
# contract last dims of both operands: (M, K) . (N, K) -> (M, N)
TRANS_B = (((1,), (1,)), ((), ()))


# ------------------------------ Pallas kernel ------------------------------ #

def self_attention_kernel(tq, x_ref, wq_ref, bq_ref, wk_ref, bk_ref,
                          wv_ref, bv_ref, gamma_ref, o_ref, k_scr, v_scr):
    qi = pl.program_id(1)

    # Key / value 1x1 convs over the WHOLE sample, computed once per sample
    # (query-tile axis is the innermost, "arbitrary" grid dim) and cached in
    # bf16 VMEM scratch.
    @pl.when(qi == 0)
    def _():
        x_bf = x_ref[...].astype(BF16)                                # (C, HW)
        k_scr[...] = (jnp.dot(wk_ref[...], x_bf,
                              preferred_element_type=F32)
                      + bk_ref[...]).astype(BF16)                     # (C8, HW)
        v_scr[...] = (jnp.dot(wv_ref[...], x_bf,
                              preferred_element_type=F32)
                      + bv_ref[...]).astype(BF16)                     # (C, HW)

    # This tile of TQ query pixels, sliced from the resident (C, HW) block.
    start = pl.multiple_of(qi * tq, tq)
    x_tile = x_ref[:, pl.ds(start, tq)]                               # (C, TQ) f32

    # Query 1x1 conv for this tile: (C8, C) @ (C, TQ) + (C8, 1)
    q = jnp.dot(wq_ref[...], x_tile.astype(BF16),
                preferred_element_type=F32) + bq_ref[...]             # (C8, TQ)

    # energy[i, j] = sum_c q[c, i] * k[c, j]
    energy = lax.dot_general(q.astype(BF16), k_scr[...], TRANS_A,
                             preferred_element_type=F32)              # (TQ, HW)

    # Numerically stable softmax over the key axis; normalization is deferred
    # to the (C, TQ) output (rank-1 ones matmul gives the row sums lane-dense).
    m = jnp.max(energy, axis=-1, keepdims=True)                       # (TQ, 1)
    p = jnp.exp(energy - m)                                           # (TQ, HW)
    p_bf = p.astype(BF16)

    ones_row = jnp.ones((1, p.shape[-1]), dtype=BF16)
    s_row = lax.dot_general(ones_row, p_bf, TRANS_B,
                            preferred_element_type=F32)               # (1, TQ)

    # out_unnorm[c, i] = sum_j v[c, j] * p[i, j]  -> lane-dense (C, TQ)
    out_un = lax.dot_general(v_scr[...], p_bf, TRANS_B,
                             preferred_element_type=F32)              # (C, TQ)

    inv_row = pl.reciprocal(s_row, approx=True)                       # (1, TQ)
    o_ref[...] = gamma_ref[0, 0] * (out_un * inv_row) + x_tile


# -------------------------------- wrapper ----------------------------------- #

def self_attention_pallas(x_nchw, params, *, tq=256):
    """params = (wq, bq, wk, bk, wv, bv, gamma); wq/wk: (C//8, C), wv: (C, C)."""
    wq, bq, wk, bk, wv, bv, gamma = params
    B, C, H, W = x_nchw.shape
    HW = H * W
    C8 = wq.shape[0]

    tq = min(tq, HW)
    if HW % tq != 0:
        # TODO(synk): pad HW to a multiple of 128 / mask the tail tile instead
        # of falling back to one giant tile for large non-divisible HW.
        tq = HW
    nq = HW // tq

    x_flat = x_nchw.reshape(B, C, HW).astype(F32)      # pixels on lanes

    wq_bf = wq.astype(BF16)
    wk_bf = wk.astype(BF16)
    wv_bf = wv.astype(BF16)
    bq_col = jnp.reshape(bq, (C8, 1)).astype(F32)
    bk_col = jnp.reshape(bk, (C8, 1)).astype(F32)
    bv_col = jnp.reshape(bv, (C, 1)).astype(F32)
    gamma2d = jnp.reshape(jnp.asarray(gamma, F32), (1, 1))

    in_specs = [
        # full sample (C, HW): same block for every query tile of sample b
        pl.BlockSpec((None, C, HW), lambda b, qi: (b, 0, 0)),
        pl.BlockSpec((C8, C), lambda b, qi: (0, 0)),    # wq  (bf16)
        pl.BlockSpec((C8, 1), lambda b, qi: (0, 0)),    # bq  (f32 col)
        pl.BlockSpec((C8, C), lambda b, qi: (0, 0)),    # wk  (bf16)
        pl.BlockSpec((C8, 1), lambda b, qi: (0, 0)),    # bk  (f32 col)
        pl.BlockSpec((C, C), lambda b, qi: (0, 0)),     # wv  (bf16)
        pl.BlockSpec((C, 1), lambda b, qi: (0, 0)),     # bv  (f32 col)
        pl.BlockSpec((1, 1), lambda b, qi: (0, 0),
                     memory_space=pltpu.MemorySpace.SMEM),  # gamma scalar
    ]

    out = pl.pallas_call(
        functools.partial(self_attention_kernel, tq),
        out_shape=jax.ShapeDtypeStruct((B, C, HW), F32),
        grid_spec=pltpu.PrefetchScalarGridSpec(
            num_scalar_prefetch=0,
            grid=(B, nq),
            in_specs=in_specs,
            out_specs=pl.BlockSpec((None, C, tq), lambda b, qi: (b, 0, qi)),
            scratch_shapes=[pltpu.VMEM((C8, HW), BF16),
                            pltpu.VMEM((C, HW), BF16)]),
        compiler_params=pltpu.CompilerParams(
            dimension_semantics=("parallel", "arbitrary"),
            vmem_limit_bytes=32 * 1024 * 1024),
    )(x_flat, wq_bf, bq_col, wk_bf, bk_col, wv_bf, bv_col, gamma2d)

    return out.reshape(B, C, H, W)


# --------------------------- plain-JAX reference ---------------------------- #

def self_attention_ref(x, params):
    wq, bq, wk, bk, wv, bv, gamma = params
    B, C, H, W = x.shape
    xf = x.reshape(B, C, H * W)
    q = jnp.einsum('oc,bcn->bon', wq, xf) + bq[None, :, None]   # (B, C8, HW)
    k = jnp.einsum('oc,bcn->bon', wk, xf) + bk[None, :, None]   # (B, C8, HW)
    v = jnp.einsum('oc,bcn->bon', wv, xf) + bv[None, :, None]   # (B, C,  HW)
    energy = jnp.einsum('bci,bcj->bij', q, k)                   # (B, HW, HW)
    att = jax.nn.softmax(energy, axis=-1)
    out = jnp.einsum('bcj,bij->bci', v, att)                    # (B, C, HW)
    out = gamma * out + xf
    return out.reshape(B, C, H, W)


# ---------------------------------- main ------------------------------------ #

if __name__ == "__main__":
    # in_dim must be >= 8 because the module uses in_dim // 8 for q/k channels.
    B, C, H, W = 2, 32, 16, 16
    C8 = C // 8

    key = jax.random.PRNGKey(0)
    kx, kwq, kbq, kwk, kbk, kwv, kbv, kg = jax.random.split(key, 8)

    x = jax.random.normal(kx, (B, C, H, W), dtype=jnp.float32)

    # nn.Conv2d(kernel_size=1) default init: U(+/- 1/sqrt(fan_in)), fan_in = C.
    bound = 1.0 / math.sqrt(C)
    u = lambda k, shape: jax.random.uniform(
        k, shape, minval=-bound, maxval=bound, dtype=jnp.float32)
    wq, bq = u(kwq, (C8, C)), u(kbq, (C8,))
    wk, bk = u(kwk, (C8, C)), u(kbk, (C8,))
    wv, bv = u(kwv, (C, C)), u(kbv, (C,))
    gamma = 0.02 * jax.random.normal(kg, (), dtype=jnp.float32)  # ~N(0, 0.02)

    params = (wq, bq, wk, bk, wv, bv, gamma)

    out = jax.block_until_ready(self_attention_pallas(x, params))
    ref = jax.block_until_ready(self_attention_ref(x, params))

    # bf16 MXU operands + approx reciprocal -> looser tolerance than pure f32.
    np.testing.assert_allclose(np.asarray(out), np.asarray(ref),
                               rtol=2e-2, atol=2e-2)
    assert out.shape == (B, C, H, W)
    print("KERNEL_OK")
</pallas_src>

<mosaic_0001>
module attributes {stable_mosaic.version = 11 : i64} {
  func.func @self_attention_kernel(%arg0: i32, %arg1: i32, %arg2: memref<1x32x256xf32, #tpu.memory_space<vmem>>, %arg3: memref<4x32xbf16, #tpu.memory_space<vmem>>, %arg4: memref<4x1xf32, #tpu.memory_space<vmem>>, %arg5: memref<4x32xbf16, #tpu.memory_space<vmem>>, %arg6: memref<4x1xf32, #tpu.memory_space<vmem>>, %arg7: memref<32x32xbf16, #tpu.memory_space<vmem>>, %arg8: memref<32x1xf32, #tpu.memory_space<vmem>>, %arg9: memref<1x1xf32, #tpu.memory_space<smem>>, %arg10: memref<1x32x256xf32, #tpu.memory_space<vmem>>, %arg11: memref<4x256xbf16, #tpu.memory_space<vmem>>, %arg12: memref<32x256xbf16, #tpu.memory_space<vmem>>) attributes {dimension_semantics = [#tpu.dimension_semantics<parallel>, #tpu.dimension_semantics<arbitrary>], iteration_bounds = array<i64: 2, 1>, scalar_prefetch = 0 : i64, scratch_operands = 2 : i64, tpu.core_type = #tpu.core_type<tc>, window_params = [{transform_indices = @transform_0, window_bounds = array<i64: 1, 32, 256>}, {pipeline_mode = #tpu.pipeline_mode<synchronous>, transform_indices = @transform_1, window_bounds = array<i64: 4, 32>}, {pipeline_mode = #tpu.pipeline_mode<synchronous>, transform_indices = @transform_2, window_bounds = array<i64: 4, 1>}, {pipeline_mode = #tpu.pipeline_mode<synchronous>, transform_indices = @transform_3, window_bounds = array<i64: 4, 32>}, {pipeline_mode = #tpu.pipeline_mode<synchronous>, transform_indices = @transform_4, window_bounds = array<i64: 4, 1>}, {pipeline_mode = #tpu.pipeline_mode<synchronous>, transform_indices = @transform_5, window_bounds = array<i64: 32, 32>}, {pipeline_mode = #tpu.pipeline_mode<synchronous>, transform_indices = @transform_6, window_bounds = array<i64: 32, 1>}, {transform_indices = @transform_7, window_bounds = array<i64: 1, 1>}, {transform_indices = @transform_8, window_bounds = array<i64: 1, 32, 256>}]} {
    %c0_i32 = arith.constant 0 : i32
    %0 = arith.cmpi eq, %arg1, %c0_i32 : i32
    %1 = arith.extui %0 : i1 to i32
    %c0_i32_0 = arith.constant 0 : i32
    %2 = arith.cmpi ne, %1, %c0_i32_0 : i32
    scf.if %2 {
      %c0_20 = arith.constant 0 : index
      %c0_21 = arith.constant 0 : index
      %c0_22 = arith.constant 0 : index
      %37 = vector.load %arg2[%c0_20, %c0_21, %c0_22] : memref<1x32x256xf32, #tpu.memory_space<vmem>>, vector<1x32x256xf32>
      %38 = vector.shape_cast %37 : vector<1x32x256xf32> to vector<32x256xf32>
      %39 = arith.truncf %38 : vector<32x256xf32> to vector<32x256xbf16>
      %c0_23 = arith.constant 0 : index
      %c0_24 = arith.constant 0 : index
      %40 = vector.load %arg5[%c0_23, %c0_24] : memref<4x32xbf16, #tpu.memory_space<vmem>>, vector<4x32xbf16>
      %cst_25 = arith.constant dense<0.000000e+00> : vector<4x256xf32>
      %41 = tpu.matmul %40, %39, %cst_25 {dimension_numbers = #tpu.dot_dimension_numbers<[1], [0], [0], [1], [0, 0, 1, 1], [], []>} : vector<4x32xbf16>, vector<32x256xbf16>, vector<4x256xf32> -> vector<4x256xf32>
      %c0_26 = arith.constant 0 : index
      %c0_27 = arith.constant 0 : index
      %42 = vector.load %arg6[%c0_26, %c0_27] : memref<4x1xf32, #tpu.memory_space<vmem>>, vector<4x1xf32>
      %43 = vector.broadcast %42 : vector<4x1xf32> to vector<4x256xf32>
      %44 = arith.addf %41, %43 : vector<4x256xf32>
      %45 = arith.truncf %44 : vector<4x256xf32> to vector<4x256xbf16>
      %c0_28 = arith.constant 0 : index
      %c0_29 = arith.constant 0 : index
      %46 = vector.load %arg11[%c0_28, %c0_29] : memref<4x256xbf16, #tpu.memory_space<vmem>>, vector<4x256xbf16>
      tpu.vector_store %arg11[%c0_28, %c0_29], %45 {strides = array<i32>} : memref<4x256xbf16, #tpu.memory_space<vmem>>, vector<4x256xbf16>,
      %c0_30 = arith.constant 0 : index
      %c0_31 = arith.constant 0 : index
      %47 = vector.load %arg7[%c0_30, %c0_31] : memref<32x32xbf16, #tpu.memory_space<vmem>>, vector<32x32xbf16>
      %cst_32 = arith.constant dense<0.000000e+00> : vector<32x256xf32>
      %48 = tpu.matmul %47, %39, %cst_32 {dimension_numbers = #tpu.dot_dimension_numbers<[1], [0], [0], [1], [0, 0, 1, 1], [], []>} : vector<32x32xbf16>, vector<32x256xbf16>, vector<32x256xf32> -> vector<32x256xf32>
      %c0_33 = arith.constant 0 : index
      %c0_34 = arith.constant 0 : index
      %49 = vector.load %arg8[%c0_33, %c0_34] : memref<32x1xf32, #tpu.memory_space<vmem>>, vector<32x1xf32>
      %50 = vector.broadcast %49 : vector<32x1xf32> to vector<32x256xf32>
      %51 = arith.addf %48, %50 : vector<32x256xf32>
      %52 = arith.truncf %51 : vector<32x256xf32> to vector<32x256xbf16>
      %c0_35 = arith.constant 0 : index
      %c0_36 = arith.constant 0 : index
      %53 = vector.load %arg12[%c0_35, %c0_36] : memref<32x256xbf16, #tpu.memory_space<vmem>>, vector<32x256xbf16>
      tpu.vector_store %arg12[%c0_35, %c0_36], %52 {strides = array<i32>} : memref<32x256xbf16, #tpu.memory_space<vmem>>, vector<32x256xbf16>,
    } else {
    }
    %c256_i32 = arith.constant 256 : i32
    %3 = arith.muli %arg1, %c256_i32 : i32
    %4 = tpu.assume_multiple %3, 256 : i32
    %c0 = arith.constant 0 : index
    %c0_1 = arith.constant 0 : index
    %5 = arith.index_cast %4 : i32 to index
    %6 = vector.load %arg2[%c0, %c0_1, %5] : memref<1x32x256xf32, #tpu.memory_space<vmem>>, vector<1x32x256xf32>
    %7 = vector.shape_cast %6 : vector<1x32x256xf32> to vector<32x256xf32>
    %c0_2 = arith.constant 0 : index
    %c0_3 = arith.constant 0 : index
    %8 = vector.load %arg3[%c0_2, %c0_3] : memref<4x32xbf16, #tpu.memory_space<vmem>>, vector<4x32xbf16>
    %9 = arith.truncf %7 : vector<32x256xf32> to vector<32x256xbf16>
    %cst = arith.constant dense<0.000000e+00> : vector<4x256xf32>
    %10 = tpu.matmul %8, %9, %cst {dimension_numbers = #tpu.dot_dimension_numbers<[1], [0], [0], [1], [0, 0, 1, 1], [], []>} : vector<4x32xbf16>, vector<32x256xbf16>, vector<4x256xf32> -> vector<4x256xf32>
    %c0_4 = arith.constant 0 : index
    %c0_5 = arith.constant 0 : index
    %11 = vector.load %arg4[%c0_4, %c0_5] : memref<4x1xf32, #tpu.memory_space<vmem>>, vector<4x1xf32>
    %12 = vector.broadcast %11 : vector<4x1xf32> to vector<4x256xf32>
    %13 = arith.addf %10, %12 : vector<4x256xf32>
    %14 = arith.truncf %13 : vector<4x256xf32> to vector<4x256xbf16>
    %c0_6 = arith.constant 0 : index
    %c0_7 = arith.constant 0 : index
    %15 = vector.load %arg11[%c0_6, %c0_7] : memref<4x256xbf16, #tpu.memory_space<vmem>>, vector<4x256xbf16>
    %cst_8 = arith.constant dense<0.000000e+00> : vector<256x256xf32>
    %16 = tpu.matmul %14, %15, %cst_8 {dimension_numbers = #tpu.dot_dimension_numbers<[0], [0], [1], [1], [0, 1, 1, 1], [], []>} : vector<4x256xbf16>, vector<4x256xbf16>, vector<256x256xf32> -> vector<256x256xf32>
    %cst_9 = arith.constant dense<0xFF800000> : vector<256xf32>
    %17 = vector.multi_reduction <maximumf>, %16, %cst_9 [1] : vector<256x256xf32> to vector<256xf32>
    %18 = vector.shape_cast %17 : vector<256xf32> to vector<256x1xf32>
    %19 = vector.broadcast %18 : vector<256x1xf32> to vector<256x256xf32>
    %20 = arith.subf %16, %19 : vector<256x256xf32>
    %21 = math.exp %20 : vector<256x256xf32>
    %22 = arith.truncf %21 : vector<256x256xf32> to vector<256x256xbf16>
    %cst_10 = arith.constant 1.000000e+00 : bf16
    %23 = vector.broadcast %cst_10 : bf16 to vector<1x256xbf16>
    %cst_11 = arith.constant dense<0.000000e+00> : vector<1x256xf32>
    %24 = tpu.matmul %23, %22, %cst_11 {dimension_numbers = #tpu.dot_dimension_numbers<[1], [1], [0], [0], [0, 0, 1, 0], [], []>} : vector<1x256xbf16>, vector<256x256xbf16>, vector<1x256xf32> -> vector<1x256xf32>
    %c0_12 = arith.constant 0 : index
    %c0_13 = arith.constant 0 : index
    %25 = vector.load %arg12[%c0_12, %c0_13] : memref<32x256xbf16, #tpu.memory_space<vmem>>, vector<32x256xbf16>
    %cst_14 = arith.constant dense<0.000000e+00> : vector<32x256xf32>
    %26 = tpu.matmul %25, %22, %cst_14 {dimension_numbers = #tpu.dot_dimension_numbers<[1], [1], [0], [0], [0, 0, 1, 0], [], []>} : vector<32x256xbf16>, vector<256x256xbf16>, vector<32x256xf32> -> vector<32x256xf32>
    %27 = tpu.reciprocal %24 {approx = true} : vector<1x256xf32> -> vector<1x256xf32>
    %c0_15 = arith.constant 0 : index
    %c0_16 = arith.constant 0 : index
    %28 = memref.load %arg9[%c0_15, %c0_16] : memref<1x1xf32, #tpu.memory_space<smem>>
    %29 = vector.broadcast %27 : vector<1x256xf32> to vector<32x256xf32>
    %30 = arith.mulf %26, %29 : vector<32x256xf32>
    %31 = vector.broadcast %28 : f32 to vector<32x256xf32>
    %32 = arith.mulf %31, %30 : vector<32x256xf32>
    %33 = arith.addf %32, %7 : vector<32x256xf32>
    %c0_17 = arith.constant 0 : index
    %c0_18 = arith.constant 0 : index
    %c0_19 = arith.constant 0 : index
    %34 = vector.load %arg10[%c0_17, %c0_18, %c0_19] : memref<1x32x256xf32, #tpu.memory_space<vmem>>, vector<1x32x256xf32>
    %35 = vector.shape_cast %34 : vector<1x32x256xf32> to vector<32x256xf32>
    %36 = vector.shape_cast %33 : vector<32x256xf32> to vector<1x32x256xf32>
    tpu.vector_store %arg10[%c0_17, %c0_18, %c0_19], %36 {strides = array<i32>} : memref<1x32x256xf32, #tpu.memory_space<vmem>>, vector<1x32x256xf32>,
    return
  }
  func.func @transform_0(%arg0: i32, %arg1: i32) -> (i32, i32, i32) {
    %c0_i32 = arith.constant 0 : i32
    %c0_i32_0 = arith.constant 0 : i32
    %c0_i32_1 = arith.constant 0 : i32
    return %arg0, %c0_i32, %c0_i32_0 : i32, i32, i32
  }
  func.func @transform_1(%arg0: i32, %arg1: i32) -> (i32, i32) {
    %c0_i32 = arith.constant 0 : i32
    %c0_i32_0 = arith.constant 0 : i32
    %c0_i32_1 = arith.constant 0 : i32
    return %c0_i32, %c0_i32_0 : i32, i32
  }
  func.func @transform_2(%arg0: i32, %arg1: i32) -> (i32, i32) {
    %c0_i32 = arith.constant 0 : i32
    %c0_i32_0 = arith.constant 0 : i32
    %c0_i32_1 = arith.constant 0 : i32
    return %c0_i32, %c0_i32_0 : i32, i32
  }
  func.func @transform_3(%arg0: i32, %arg1: i32) -> (i32, i32) {
    %c0_i32 = arith.constant 0 : i32
    %c0_i32_0 = arith.constant 0 : i32
    %c0_i32_1 = arith.constant 0 : i32
    return %c0_i32, %c0_i32_0 : i32, i32
  }
  func.func @transform_4(%arg0: i32, %arg1: i32) -> (i32, i32) {
    %c0_i32 = arith.constant 0 : i32
    %c0_i32_0 = arith.constant 0 : i32
    %c0_i32_1 = arith.constant 0 : i32
    return %c0_i32, %c0_i32_0 : i32, i32
  }
  func.func @transform_5(%arg0: i32, %arg1: i32) -> (i32, i32) {
    %c0_i32 = arith.constant 0 : i32
    %c0_i32_0 = arith.constant 0 : i32
    %c0_i32_1 = arith.constant 0 : i32
    return %c0_i32, %c0_i32_0 : i32, i32
  }
  func.func @transform_6(%arg0: i32, %arg1: i32) -> (i32, i32) {
    %c0_i32 = arith.constant 0 : i32
    %c0_i32_0 = arith.constant 0 : i32
    %c0_i32_1 = arith.constant 0 : i32
    return %c0_i32, %c0_i32_0 : i32, i32
  }
  func.func @transform_7(%arg0: i32, %arg1: i32) -> (i32, i32) {
    %c0_i32 = arith.constant 0 : i32
    %c0_i32_0 = arith.constant 0 : i32
    %c0_i32_1 = arith.constant 0 : i32
    return %c0_i32, %c0_i32_0 : i32, i32
  }
  func.func @transform_8(%arg0: i32, %arg1: i32) -> (i32, i32, i32) {
    %c0_i32 = arith.constant 0 : i32
    %c0_i32_0 = arith.constant 0 : i32
    return %arg0, %c0_i32, %arg1 : i32, i32, i32
  }
}

</mosaic_0001>

<llo_original>
// kernel: tpu_custom_call.1
$region0: #{tpu_custom_call.1}
  #allocation0 [shape = 'u32[]', space=smem, size = 0x4, offset = 0x4, fixed_abs, tag = 'smem constant byte address 0x4 - core index']
  #allocation1 [shape = 'u32[144,128]{1,0:T(1,128)}', space=vmem, size = 0x12000, scoped, tag = 'internal scratch']
  #allocation2 [shape = 'bf16[4,256]{1,0:T(4,128)(2,1)}', space=vmem, size = 0x800, scoped, tag = 'scratch operand']
  #allocation3 [shape = 'bf16[32,256]{1,0:T(16,128)(2,1)}', space=vmem, size = 0x4000, scoped, tag = 'scratch operand']
  #allocation4 [shape = 'f32[1,1]{1,0:T(1,128)S(6)}', space=smem, size = 0x200, scoped, tag = 'scoped memory for tpu_custom_call.1']
  %s0 = inlined_call_operand.hbm [shape: f32[2,32,256], index: 0, kind: input, shape index: {}]
  %s1 = inlined_call_operand.vmem [shape: bf16[4,32], index: 1, kind: input, shape index: {}]
  %s2 = inlined_call_operand.vmem [shape: f32[4,1], index: 2, kind: input, shape index: {}]
  %s3 = inlined_call_operand.vmem [shape: bf16[4,32], index: 3, kind: input, shape index: {}]
  %s4 = inlined_call_operand.vmem [shape: f32[4,1], index: 4, kind: input, shape index: {}]
  %s5 = inlined_call_operand.vmem [shape: bf16[32,32], index: 5, kind: input, shape index: {}]
  %s6 = inlined_call_operand.vmem [shape: f32[32,1], index: 6, kind: input, shape index: {}]
  %s7 = inlined_call_operand.<no memory space> [shape: f32[1,1], index: 7, kind: input, shape index: {}]
  %s8 = inlined_call_operand.hbm [shape: f32[2,32,256], index: 8, kind: output, shape index: {}]
  %s9 = sld [smem:[#allocation0]]
  $region73: #{tpu_custom_call.1} parent=0
    _
  %s11 = ssub.s32 1, %s9
  %s12 = scalar_select 0, %s11, %s9
  %13 = sst [smem:[#allocation4]] %s7
  $region1: #{tpu_custom_call.1} parent=0
    #allocation5 [shape = 'u8[65536]{0}', space=vmem, size = 0x10000, scoped, tag = 'input window, operand 0']
    #allocation6 [shape = 's32[2]{0}', space=sflag, size = 0x8, scoped, tag = 'scoped memory for tpu_custom_call.1']
    #allocation7 [shape = 's32[2]{0}', space=sflag, size = 0x8, scoped, tag = 'scoped memory for tpu_custom_call.1']
    #allocation8 [shape = 'u8[65536]{0}', space=vmem, size = 0x10000, scoped, tag = 'output window, operand 0']
    %14 = vsyncpa [#allocation6], 0
    %s15 = scalar_lea.sflag [#allocation6], 1
    %16 = vsyncpa %s15, 0
    %17 = vsyncpa [#allocation7], 0
    %s18 = scalar_lea.sflag [#allocation7], 1
    %19 = vsyncpa %s18, 0
    loop: start=0, step=1, limit=4
    $region2: #{tpu_custom_call.1} parent=1 // loop_pre_header
      _
    $region3: #{tpu_custom_call.1} parent=1 // loop_header
      %s21 = sphi 0, %s25
      %p22 = scmp.ge.s32.totalorder %s21, 4
      %s28 = sphi 0, %s40
      %s29 = sphi 0, %s36
      %s30 = sphi 0, %s28
      %s31 = sphi 0, %s29
      %s32 = sphi 0, %s30
      %s33 = sphi 0, %s31
      %s43 = sphi 0, %s45
      %s46 = sphi 0, %s43
      %s47 = sphi 0, %s46
      %s63 = sphi 0, %s47
      %s67 = sphi 0, %s67
      %s69 = sphi 0, %s67
      %s70 = sphi 0, %s69
      %s84 = sphi 0, %s70
      %s88 = sphi 0, %s88
      %s90 = sphi 0, %s88
      %s91 = sphi 0, %s90
      %s105 = sphi 0, %s91
      %s109 = sphi 0, %s109
      %s111 = sphi 0, %s109
      %s112 = sphi 0, %s111
      %s126 = sphi 0, %s112
      %s130 = sphi 0, %s130
      %s132 = sphi 0, %s130
      %s133 = sphi 0, %s132
      %s147 = sphi 0, %s133
      %s151 = sphi 0, %s151
      %s153 = sphi 0, %s151
      %s154 = sphi 0, %s153
      %s168 = sphi 0, %s154
      %s172 = sphi 0, %s172
      %s174 = sphi 0, %s172
      %s175 = sphi 0, %s174
      %s189 = sphi 0, %s175
      %s193 = sphi 0, %s193
      %s195 = sphi 0, %s193
      %s196 = sphi 0, %s195
      %s210 = sphi 0, %s196
      %s218 = sphi 0, %s220
      %s221 = sphi 0, %s218
      %s222 = sphi 0, %s221
      %s238 = sphi 0, %s222
    $region4: #{tpu_custom_call.1} parent=1 // loop_header_branch
      %24 = sbr.rel (%p22) target = $region8
    $region5: #{tpu_custom_call.1} parent=1 // loop_body
      %s26 = ssub.s32 %s21, 1
      %s27 = ssub.s32 %s21, 2
      %s34 = sadd.s32 1, %s29
      %p35 = scmp.ge.s32.totalorder %s34, 1
      %s36 = scalar_select %p35, 0, %s34
      %s37 = sadd.s32 1, %s28
      %s38 = scalar_select %p35, %s37, %s28
      %p39 = scmp.ge.s32.totalorder %s38, 2
      %s40 = scalar_select %p39, 0, %s38
      %s41 = ssub.s32 %s28, %s40
      %p42 = scmp.eq.s32.totalorder %s41, 0
      %s44 = sadd.s32 %s43, 1
      %s45 = scalar_select %p42, %s43, %s44
      %p48 = pneg %p42
      %p49 = scmp.eq.s32.totalorder %s21, 1
      %p50 = por %p48, %p49
      %p51 = scmp.ne.s32.totalorder %s43, %s46
      %p52 = scmp.eq.s32.totalorder %s21, 0
      %p53 = por %p51, %p52
      %p54 = scmp.ne.s32.totalorder %s43, %s46
      %p55 = scmp.eq.s32.totalorder %s26, 1
      %p56 = por %p54, %p55
      %p57 = scmp.ne.s32.totalorder %s46, %s47
      %p58 = scmp.eq.s32.totalorder %s26, 0
      %p59 = por %p57, %p58
      %p60 = scmp.ne.s32.totalorder %s46, %s47
      %p61 = scmp.eq.s32.totalorder %s27, 1
      %p62 = por %p60, %p61
      %p64 = scmp.ne.s32.totalorder %s47, %s63
      %p65 = scmp.eq.s32.totalorder %s27, 0
      %p66 = por %p64, %p65
      %s68 = sadd.s32 %s67, 1
      %p71 = scmp.eq.s32.totalorder %s21, 1
      %p72 = scmp.ne.s32.totalorder %s67, %s69
      %p73 = scmp.eq.s32.totalorder %s21, 0
      %p74 = por %p72, %p73
      %p75 = scmp.ne.s32.totalorder %s67, %s69
      %p76 = scmp.eq.s32.totalorder %s26, 1
      %p77 = por %p75, %p76
      %p78 = scmp.ne.s32.totalorder %s69, %s70
      %p79 = scmp.eq.s32.totalorder %s26, 0
      %p80 = por %p78, %p79
      %p81 = scmp.ne.s32.totalorder %s69, %s70
      %p82 = scmp.eq.s32.totalorder %s27, 1
      %p83 = por %p81, %p82
      %p85 = scmp.ne.s32.totalorder %s70, %s84
      %p86 = scmp.eq.s32.totalorder %s27, 0
      %p87 = por %p85, %p86
      %s89 = sadd.s32 %s88, 1
      %p92 = scmp.eq.s32.totalorder %s21, 1
      %p93 = scmp.ne.s32.totalorder %s88, %s90
      %p94 = scmp.eq.s32.totalorder %s21, 0
      %p95 = por %p93, %p94
      %p96 = scmp.ne.s32.totalorder %s88, %s90
      %p97 = scmp.eq.s32.totalorder %s26, 1
      %p98 = por %p96, %p97
      %p99 = scmp.ne.s32.totalorder %s90, %s91
      %p100 = scmp.eq.s32.totalorder %s26, 0
      %p101 = por %p99, %p100
      %p102 = scmp.ne.s32.totalorder %s90, %s91
      %p103 = scmp.eq.s32.totalorder %s27, 1
      %p104 = por %p102, %p103
      %p106 = scmp.ne.s32.totalorder %s91, %s105
      %p107 = scmp.eq.s32.totalorder %s27, 0
      %p108 = por %p106, %p107
      %s110 = sadd.s32 %s109, 1
      %p113 = scmp.eq.s32.totalorder %s21, 1
      %p114 = scmp.ne.s32.totalorder %s109, %s111
      %p115 = scmp.eq.s32.totalorder %s21, 0
      %p116 = por %p114, %p115
      %p117 = scmp.ne.s32.totalorder %s109, %s111
      %p118 = scmp.eq.s32.totalorder %s26, 1
      %p119 = por %p117, %p118
      %p120 = scmp.ne.s32.totalorder %s111, %s112
      %p121 = scmp.eq.s32.totalorder %s26, 0
      %p122 = por %p120, %p121
      %p123 = scmp.ne.s32.totalorder %s111, %s112
      %p124 = scmp.eq.s32.totalorder %s27, 1
      %p125 = por %p123, %p124
      %p127 = scmp.ne.s32.totalorder %s112, %s126
      %p128 = scmp.eq.s32.totalorder %s27, 0
      %p129 = por %p127, %p128
      %s131 = sadd.s32 %s130, 1
      %p134 = scmp.eq.s32.totalorder %s21, 1
      %p135 = scmp.ne.s32.totalorder %s130, %s132
      %p136 = scmp.eq.s32.totalorder %s21, 0
      %p137 = por %p135, %p136
      %p138 = scmp.ne.s32.totalorder %s130, %s132
      %p139 = scmp.eq.s32.totalorder %s26, 1
      %p140 = por %p138, %p139
      %p141 = scmp.ne.s32.totalorder %s132, %s133
      %p142 = scmp.eq.s32.totalorder %s26, 0
      %p143 = por %p141, %p142
      %p144 = scmp.ne.s32.totalorder %s132, %s133
      %p145 = scmp.eq.s32.totalorder %s27, 1
      %p146 = por %p144, %p145
      %p148 = scmp.ne.s32.totalorder %s133, %s147
      %p149 = scmp.eq.s32.totalorder %s27, 0
      %p150 = por %p148, %p149
      %s152 = sadd.s32 %s151, 1
      %p155 = scmp.eq.s32.totalorder %s21, 1
      %p156 = scmp.ne.s32.totalorder %s151, %s153
      %p157 = scmp.eq.s32.totalorder %s21, 0
      %p158 = por %p156, %p157
      %p159 = scmp.ne.s32.totalorder %s151, %s153
      %p160 = scmp.eq.s32.totalorder %s26, 1
      %p161 = por %p159, %p160
      %p162 = scmp.ne.s32.totalorder %s153, %s154
      %p163 = scmp.eq.s32.totalorder %s26, 0
      %p164 = por %p162, %p163
      %p165 = scmp.ne.s32.totalorder %s153, %s154
      %p166 = scmp.eq.s32.totalorder %s27, 1
      %p167 = por %p165, %p166
      %p169 = scmp.ne.s32.totalorder %s154, %s168
      %p170 = scmp.eq.s32.totalorder %s27, 0
      %p171 = por %p169, %p170
      %s173 = sadd.s32 %s172, 1
      %p176 = scmp.eq.s32.totalorder %s21, 1
      %p177 = scmp.ne.s32.totalorder %s172, %s174
      %p178 = scmp.eq.s32.totalorder %s21, 0
      %p179 = por %p177, %p178
      %p180 = scmp.ne.s32.totalorder %s172, %s174
      %p181 = scmp.eq.s32.totalorder %s26, 1
      %p182 = por %p180, %p181
      %p183 = scmp.ne.s32.totalorder %s174, %s175
      %p184 = scmp.eq.s32.totalorder %s26, 0
      %p185 = por %p183, %p184
      %p186 = scmp.ne.s32.totalorder %s174, %s175
      %p187 = scmp.eq.s32.totalorder %s27, 1
      %p188 = por %p186, %p187
      %p190 = scmp.ne.s32.totalorder %s175, %s189
      %p191 = scmp.eq.s32.totalorder %s27, 0
      %p192 = por %p190, %p191
      %s194 = sadd.s32 %s193, 1
      %p197 = scmp.eq.s32.totalorder %s21, 1
      %p198 = scmp.ne.s32.totalorder %s193, %s195
      %p199 = scmp.eq.s32.totalorder %s21, 0
      %p200 = por %p198, %p199
      %p201 = scmp.ne.s32.totalorder %s193, %s195
      %p202 = scmp.eq.s32.totalorder %s26, 1
      %p203 = por %p201, %p202
      %p204 = scmp.ne.s32.totalorder %s195, %s196
      %p205 = scmp.eq.s32.totalorder %s26, 0
      %p206 = por %p204, %p205
      %p207 = scmp.ne.s32.totalorder %s195, %s196
      %p208 = scmp.eq.s32.totalorder %s27, 1
      %p209 = por %p207, %p208
      %p211 = scmp.ne.s32.totalorder %s196, %s210
      %p212 = scmp.eq.s32.totalorder %s27, 0
      %p213 = por %p211, %p212
      %s214 = ssub.s32 %s28, %s40
      %s215 = ssub.s32 %s29, %s36
      %s216 = sor.u32 %s214, %s215
      %p217 = scmp.eq.s32.totalorder %s216, 0
      %s219 = sadd.s32 %s218, 1
      %s220 = scalar_select %p217, %s218, %s219
      %p223 = pneg %p217
      %p224 = scmp.eq.s32.totalorder %s21, 1
      %p225 = por %p223, %p224
      %p226 = scmp.ne.s32.totalorder %s218, %s221
      %p227 = scmp.eq.s32.totalorder %s21, 0
      %p228 = por %p226, %p227
      %p229 = scmp.ne.s32.totalorder %s218, %s221
      %p230 = scmp.eq.s32.totalorder %s26, 1
      %p231 = por %p229, %p230
      %p232 = scmp.ne.s32.totalorder %s221, %s222
      %p233 = scmp.eq.s32.totalorder %s26, 0
      %p234 = por %p232, %p233
      %p235 = scmp.ne.s32.totalorder %s221, %s222
      %p236 = scmp.eq.s32.totalorder %s27, 1
      %p237 = por %p235, %p236
      %p239 = scmp.ne.s32.totalorder %s222, %s238
      %p240 = scmp.eq.s32.totalorder %s27, 0
      %p241 = por %p239, %p240
      %p242 = scmp.le.s32.totalorder 1, %s21
      %p243 = scmp.lt.s32.totalorder %s21, 3
      %p244 = pnand %p242, %p243
      %p245 = pneg %p244
      // Predicated region
      $region9: #{tpu_custom_call.1} parent=5 // pred_check
        _
      $region10: #{tpu_custom_call.1} parent=5 // pred_check_branch
        %247 = sbr.rel (%p244) target = $region12
      $region11: #{tpu_custom_call.1} parent=5 // pred_region
        %s248 = ssub.s32 %s21, 1
        // Predicated region
        $region13: #{tpu_custom_call.1} parent=11 // pred_check
          %p249 = pneg %p80
        $region14: #{tpu_custom_call.1} parent=11 // pred_check_branch
          %251 = sbr.rel (%p249) target = $region16
        $region15: #{tpu_custom_call.1} parent=11 // pred_region
          _
        $region16: #{tpu_custom_call.1} parent=11 // pred_fallthru
          _
        // Predicated region
        $region17: #{tpu_custom_call.1} parent=11 // pred_check
          %p252 = pneg %p101
        $region18: #{tpu_custom_call.1} parent=11 // pred_check_branch
          %254 = sbr.rel (%p252) target = $region20
        $region19: #{tpu_custom_call.1} parent=11 // pred_region
          _
        $region20: #{tpu_custom_call.1} parent=11 // pred_fallthru
          _
        // Predicated region
        $region21: #{tpu_custom_call.1} parent=11 // pred_check
          %p255 = pneg %p122
        $region22: #{tpu_custom_call.1} parent=11 // pred_check_branch
          %257 = sbr.rel (%p255) target = $region24
        $region23: #{tpu_custom_call.1} parent=11 // pred_region
          _
        $region24: #{tpu_custom_call.1} parent=11 // pred_fallthru
          _
        // Predicated region
        $region25: #{tpu_custom_call.1} parent=11 // pred_check
          %p258 = pneg %p143
        $region26: #{tpu_custom_call.1} parent=11 // pred_check_branch
          %260 = sbr.rel (%p258) target = $region28
        $region27: #{tpu_custom_call.1} parent=11 // pred_region
          _
        $region28: #{tpu_custom_call.1} parent=11 // pred_fallthru
          _
        // Predicated region
        $region29: #{tpu_custom_call.1} parent=11 // pred_check
          %p261 = pneg %p164
        $region30: #{tpu_custom_call.1} parent=11 // pred_check_branch
          %263 = sbr.rel (%p261) target = $region32
        $region31: #{tpu_custom_call.1} parent=11 // pred_region
          _
        $region32: #{tpu_custom_call.1} parent=11 // pred_fallthru
          _
        // Predicated region
        $region33: #{tpu_custom_call.1} parent=11 // pred_check
          %p264 = pneg %p185
        $region34: #{tpu_custom_call.1} parent=11 // pred_check_branch
          %266 = sbr.rel (%p264) target = $region36
        $region35: #{tpu_custom_call.1} parent=11 // pred_region
          _
        $region36: #{tpu_custom_call.1} parent=11 // pred_fallthru
          _
        // Predicated region
        $region37: #{tpu_custom_call.1} parent=11 // pred_check
          %p267 = pneg %p206
        $region38: #{tpu_custom_call.1} parent=11 // pred_check_branch
          %269 = sbr.rel (%p267) target = $region40
        $region39: #{tpu_custom_call.1} parent=11 // pred_region
          _
        $region40: #{tpu_custom_call.1} parent=11 // pred_fallthru
          _
      $region12: #{tpu_custom_call.1} parent=5 // pred_fallthru
        _
      %p270 = scmp.lt.s32.totalorder %s21, 2
      // Predicated region
      $region41: #{tpu_custom_call.1} parent=5 // pred_check
        %p271 = pneg %p270
      $region42: #{tpu_custom_call.1} parent=5 // pred_check_branch
        %273 = sbr.rel (%p271) target = $region44
      $region43: #{tpu_custom_call.1} parent=5 // pred_region
        // Predicated region
        $region45: #{tpu_custom_call.1} parent=43 // pred_check
          %p274 = pneg %p53
        $region46: #{tpu_custom_call.1} parent=43 // pred_check_branch
          %276 = sbr.rel (%p274) target = $region48
        $region47: #{tpu_custom_call.1} parent=43 // pred_region
          %s277 = sand.u32 %s43, 1
          %s278 = scalar_lea.sflag [#allocation6], %s277
          %s279 = sand.u32 %s43, 1
          %s280 = smul.addr %s279, 64
          %s281 = scalar_lea.vmem [#allocation5], %s280
          %s283 = ssub.s32 1024, 1024
          %284 = vsyncadd %s278, %s283
          %s285 = smul.addr %s28, 8
          %s286 = smul.addr %s285, 128
          %s287 = scalar_lea.hbm %s0, %s286
          %s288 = sshll.u32 %s281, 4
          %s289 = int_to_ptr.vmem [resolvable:$true] %s288
          %294 = dma.hbm_to_vmem [thread:$0]  %s287, 1024, %s289, %s278, 256, 256, 16
        $region48: #{tpu_custom_call.1} parent=43 // pred_fallthru
          _
      $region44: #{tpu_custom_call.1} parent=5 // pred_fallthru
        _
      %p295 = scmp.le.s32.totalorder 1, %s21
      %p296 = scmp.lt.s32.totalorder %s21, 3
      %p297 = pnand %p295, %p296
      %p298 = pneg %p297
      // Predicated region
      $region49: #{tpu_custom_call.1} parent=5 // pred_check
        _
      $region50: #{tpu_custom_call.1} parent=5 // pred_check_branch
        %300 = sbr.rel (%p297) target = $region52
      $region51: #{tpu_custom_call.1} parent=5 // pred_region
        %s301 = ssub.s32 %s21, 1
        %s302 = sand.u32 %s46, 1
        %s303 = scalar_lea.sflag [#allocation6], %s302
        %s304 = sand.u32 %s46, 1
        %s305 = smul.addr %s304, 64
        %s306 = scalar_lea.vmem [#allocation5], %s305
        // Predicated region
        $region53: #{tpu_custom_call.1} parent=51 // pred_check
          %p307 = pneg %p59
        $region54: #{tpu_custom_call.1} parent=51 // pred_check_branch
          %309 = sbr.rel (%p307) target = $region56
        $region55: #{tpu_custom_call.1} parent=51 // pred_region
          %310 = dma.done %s303, 1024
        $region56: #{tpu_custom_call.1} parent=51 // pred_fallthru
          _
        %s311 = sand.u32 %s46, 1
        %s312 = scalar_lea.sflag [#allocation6], %s311
        %s313 = sand.u32 %s46, 1
        %s314 = smul.addr %s313, 64
        %s315 = scalar_lea.vmem [#allocation5], %s314
        %p316 = pneg %p59
        %p317 = pneg %p56
        %p318 = pneg %p80
        %p319 = pneg %p77
        %p320 = pneg %p101
        %p321 = pneg %p98
        %p322 = pneg %p122
        %p323 = pneg %p119
        %p324 = pneg %p143
        %p325 = pneg %p140
        %p326 = pneg %p164
        %p327 = pneg %p161
        %p328 = pneg %p185
        %p329 = pneg %p182
        %p330 = pneg %p206
        %p331 = pneg %p203
        %p332 = pneg %p234
        %p333 = pneg %p231
        %s334 = sand.u32 %s221, 1
        %s335 = scalar_lea.sflag [#allocation7], %s334
        %s336 = sand.u32 %s221, 1
        %s337 = smul.addr %s336, 64
        %s338 = scalar_lea.vmem [#allocation8], %s337
        %s339 = smul.u32 2, %s31
        %p342 = scmp.eq.s32.totalorder %s31, 0
        // Predicated region
        $region57: #{tpu_custom_call.1} parent=51 // pred_check
          %p343 = pneg %p342
        $region58: #{tpu_custom_call.1} parent=51 // pred_check_branch
          %345 = sbr.rel (%p343) target = $region60
        $region59: #{tpu_custom_call.1} parent=51 // pred_region
          %v346 = vld [vmem:[%s306] sm:$0xff]
          %v347 = vld [vmem:[%s306 + $0x8] sm:$0xff]
          %v348 = vld [vmem:[%s306 + $0x10] sm:$0xff]
          %v349 = vld [vmem:[%s306 + $0x18] sm:$0xff]
          %v350 = vld [vmem:[%s306 + $0x20] sm:$0xff]
          %v351 = vld [vmem:[%s306 + $0x28] sm:$0xff]
          %v352 = vld [vmem:[%s306 + $0x30] sm:$0xff]
          %v353 = vld [vmem:[%s306 + $0x38] sm:$0xff]
          %v354 = vpack.c.bf16 %v348, %v346
          %v355 = vpack.c.bf16 %v349, %v347
          %v356 = vpack.c.bf16 %v352, %v350
          %v357 = vpack.c.bf16 %v353, %v351
          %v358 = vld [vmem:[%s3] sm:$0x3]
          %v359 = vld [vmem:[%s4] sm:$0xf]
          %361 = vset.pattern.permute.xlu0 0
          %362 = vperm.xlu0 %361, %v359
          %v363 = vpop.permute.xlu0 %362
          %vm365 = vcmask 261120
          %v367 = vsel %vm365, %v358, 0
          %369 = vmatprep.subr.bf16.mxu0 %v355
          %370 = vmatpush1.bf16.msra.mxu0 %v354
          %371 = vmatprep.subr.bf16.mxu0 %v357
          %372 = vmatpush1.bf16.msra.mxu0 %v356
          %373 = vmatprep.subr.bf16.mxu0 0
          %374 = vmatpush1.bf16.msra.mxu0 0
          %375 = vmatprep.subr.bf16.mxu0 0
          %376 = vmatpush1.bf16.msra.mxu0 0
          %377 = vmatprep.subr.bf16.mxu0 0
          %378 = vmatpush1.bf16.msra.mxu0 0
          %379 = vmatprep.subr.bf16.mxu0 0
          %380 = vmatpush1.bf16.msra.mxu0 0
          %381 = vmatprep.subr.bf16.mxu0 0
          %382 = vmatpush1.bf16.msra.mxu0 0
          %383 = vmatprep.subr.bf16.mxu0 0
          %384 = vmatpush1.bf16.msra.mxu0 0
          %385 = vmatprep.subr.bf16.mxu0 0
          %386 = vmatpush1.bf16.msra.mxu0 0
          %387 = vmatprep.subr.bf16.mxu0 0
          %388 = vmatpush1.bf16.msra.mxu0 0
          %389 = vmatprep.subr.bf16.mxu0 0
          %390 = vmatpush1.bf16.msra.mxu0 0
          %391 = vmatprep.subr.bf16.mxu0 0
          %392 = vmatpush1.bf16.msra.mxu0 0
          %393 = vmatprep.subr.bf16.mxu0 0
          %394 = vmatpush1.bf16.msra.mxu0 0
          %395 = vmatprep.subr.bf16.mxu0 0
          %396 = vmatpush1.bf16.msra.mxu0 0
          %397 = vmatprep.subr.bf16.mxu0 0
          %398 = vmatpush1.bf16.msra.mxu0 0
          %399 = vmatprep.subr.bf16.mxu0 0
          %400 = vmatpush1.bf16.msra.mxu0 0
          %401 = vmatprep.mubr.bf16.mxu0 0
          %402 = vmatmul.mubr.bf16.gmra.mrb[0].mxu0 %v367
          %v403 = vpop.f32.mrb[0].mxu0
          %v404 = vadd.f32 %v363, %v403
          %v405 = vpop.f32.mrb[0].mxu0
          %v406 = vadd.f32 %v363, %v405
          %v407 = vpop.f32.mrb[0].mxu0
          %v408 = vpop.f32.mrb[0].mxu0
          %409 = vdwg.mxu0
          %v410 = vpack.c.bf16 %v404, %v404
          %v411 = vpack.c.bf16 %v406, %v406
          %v414 = vcombine.low %v410, %v411
          %v416 = vunpack.c.l.s4 1983009808
          %v417 = vunpack.c.0.s8 %v416
          %v418 = vlaneseq
          %v419 = vshrl.u32 %v418, 7
          %v420 = vsub.s32 %v417, %v419
          %v421 = vrot.slane %v414, %v420
          %423 = vst [vmem:[#allocation2] sm:$0xf] %v421
          %v424 = vld [vmem:[%s5] sm:$0xf]
          %v425 = vld [vmem:[%s5 + $0x4] sm:$0xf]
          %v426 = vld [vmem:[%s5 + $0x8] sm:$0xf]
          %v427 = vld [vmem:[%s5 + $0xc] sm:$0xf]
          %v428 = vld [vmem:[%s6] sm:$0xff]
          %v429 = vld [vmem:[%s6 + $0x8] sm:$0xff]
          %v430 = vld [vmem:[%s6 + $0x10] sm:$0xff]
          %v431 = vld [vmem:[%s6 + $0x18] sm:$0xff]
          %433 = vset.pattern.permute.xlu0 0
          %434 = vperm.xlu0 %433, %v428
          %v435 = vpop.permute.xlu0 %434
          %438 = vset.pattern.permute.xlu0 0
          %439 = vperm.xlu0 %438, %v429
          %v440 = vpop.permute.xlu0 %439
          %443 = vset.pattern.permute.xlu0 0
          %444 = vperm.xlu0 %443, %v430
          %v445 = vpop.permute.xlu0 %444
          %448 = vset.pattern.permute.xlu0 0
          %449 = vperm.xlu0 %448, %v431
          %v450 = vpop.permute.xlu0 %449
          %v456 = vunpack.c.l.b16 %v424
          %v457 = vunpack.c.l.b16 %v425
          %v458 = vunpack.c.l.b16 %v426
          %v459 = vunpack.c.l.b16 %v427
          %v460 = vpack.c.b16 %v457, %v456
          %v461 = vpack.c.b16 %v459, %v458
          %v463 = vsel %vm365, %v460, 0
          %v466 = vsel %vm365, %v461, 0
          %468 = vmatprep.subr.bf16.mxu0 %v355
          %469 = vmatpush1.bf16.msra.mxu0 %v354
          %470 = vmatprep.subr.bf16.mxu0 %v357
          %471 = vmatpush1.bf16.msra.mxu0 %v356
          %472 = vmatprep.subr.bf16.mxu0 0
          %473 = vmatpush1.bf16.msra.mxu0 0
          %474 = vmatprep.subr.bf16.mxu0 0
          %475 = vmatpush1.bf16.msra.mxu0 0
          %476 = vmatprep.subr.bf16.mxu0 0
          %477 = vmatpush1.bf16.msra.mxu0 0
          %478 = vmatprep.subr.bf16.mxu0 0
          %479 = vmatpush1.bf16.msra.mxu0 0
          %480 = vmatprep.subr.bf16.mxu0 0
          %481 = vmatpush1.bf16.msra.mxu0 0
          %482 = vmatprep.subr.bf16.mxu0 0
          %483 = vmatpush1.bf16.msra.mxu0 0
          %484 = vmatprep.subr.bf16.mxu0 0
          %485 = vmatpush1.bf16.msra.mxu0 0
          %486 = vmatprep.subr.bf16.mxu0 0
          %487 = vmatpush1.bf16.msra.mxu0 0
          %488 = vmatprep.subr.bf16.mxu0 0
          %489 = vmatpush1.bf16.msra.mxu0 0
          %490 = vmatprep.subr.bf16.mxu0 0
          %491 = vmatpush1.bf16.msra.mxu0 0
          %492 = vmatprep.subr.bf16.mxu0 0
          %493 = vmatpush1.bf16.msra.mxu0 0
          %494 = vmatprep.subr.bf16.mxu0 0
          %495 = vmatpush1.bf16.msra.mxu0 0
          %496 = vmatprep.subr.bf16.mxu0 0
          %497 = vmatpush1.bf16.msra.mxu0 0
          %498 = vmatprep.subr.bf16.mxu0 0
          %499 = vmatpush1.bf16.msra.mxu0 0
          %500 = vmatprep.mubr.bf16.mxu0 0
          %501 = vmatmul.mubr.bf16.gmra.mrb[0].mxu0 %v463
          %v502 = vpop.f32.mrb[0].mxu0
          %v503 = vadd.f32 %v435, %v502
          %v504 = vpop.f32.mrb[0].mxu0
          %v505 = vadd.f32 %v435, %v504
          %v506 = vpop.f32.mrb[0].mxu0
          %v507 = vadd.f32 %v440, %v506
          %v508 = vpop.f32.mrb[0].mxu0
          %v509 = vadd.f32 %v440, %v508
          %510 = vmatprep.mubr.bf16.mxu0 0
          %511 = vmatmul.mubr.bf16.gmra.mrb[0].mxu0 %v466
          %v512 = vpop.f32.mrb[0].mxu0
          %v513 = vadd.f32 %v445, %v512
          %v514 = vpop.f32.mrb[0].mxu0
          %v515 = vadd.f32 %v445, %v514
          %v516 = vpop.f32.mrb[0].mxu0
          %v517 = vadd.f32 %v450, %v516
          %v518 = vpop.f32.mrb[0].mxu0
          %v519 = vadd.f32 %v450, %v518
          %520 = vdwg.mxu0
          %v521 = vpack.c.bf16 %v507, %v503
          %v522 = vpack.c.bf16 %v509, %v505
          %v523 = vpack.c.bf16 %v517, %v513
          %v524 = vpack.c.bf16 %v519, %v515
          %525 = vst [vmem:[#allocation3] sm:$0xff] %v521
          %526 = vst [vmem:[#allocation3 + $0x8] sm:$0xff] %v522
          %527 = vst [vmem:[#allocation3 + $0x10] sm:$0xff] %v523
          %528 = vst [vmem:[#allocation3 + $0x18] sm:$0xff] %v524
        $region60: #{tpu_custom_call.1} parent=51 // pred_fallthru
          _
        %s529 = smul.u32 %s31, 256
        %s530 = sshra.s32 %s529, 7
        %s531 = sand.u32 %s529, 127
        %s532 = smul.addr %s530, 8
        %s533 = scalar_lea.vmem %s306, %s532 [#allocation5]
        %v534 = vld [vmem:[%s533] sm:$0xff]
        %v535 = vld [vmem:[%s533 + $0x8] sm:$0xff]
        %v536 = vld [vmem:[%s533 + $0x10] sm:$0xff]
        %v537 = vld [vmem:[%s533 + $0x18] sm:$0xff]
        %v538 = vld [vmem:[%s533 + $0x20] sm:$0xff]
        %v539 = vld [vmem:[%s533 + $0x28] sm:$0xff]
        %v540 = vld [vmem:[%s533 + $0x30] sm:$0xff]
        %v541 = vld [vmem:[%s533 + $0x38] sm:$0xff]
        %v542 = vld [vmem:[%s1] sm:$0x3]
        %v543 = vpack.c.bf16 %v536, %v534
        %v544 = vpack.c.bf16 %v537, %v535
        %v545 = vpack.c.bf16 %v540, %v538
        %v546 = vpack.c.bf16 %v541, %v539
        %v547 = vld [vmem:[%s2] sm:$0xf]
        %549 = vset.pattern.permute.xlu0 0
        %550 = vperm.xlu0 %549, %v547
        %v551 = vpop.permute.xlu0 %550
        %vm553 = vcmask 261120
        %v555 = vsel %vm553, %v542, 0
        %557 = vmatprep.subr.bf16.mxu0 %v544
        %558 = vmatpush1.bf16.msra.mxu0 %v543
        %559 = vmatprep.subr.bf16.mxu0 %v546
        %560 = vmatpush1.bf16.msra.mxu0 %v545
        %561 = vmatprep.subr.bf16.mxu0 0
        %562 = vmatpush1.bf16.msra.mxu0 0
        %563 = vmatprep.subr.bf16.mxu0 0
        %564 = vmatpush1.bf16.msra.mxu0 0
        %565 = vmatprep.subr.bf16.mxu0 0
        %566 = vmatpush1.bf16.msra.mxu0 0
        %567 = vmatprep.subr.bf16.mxu0 0
        %568 = vmatpush1.bf16.msra.mxu0 0
        %569 = vmatprep.subr.bf16.mxu0 0
        %570 = vmatpush1.bf16.msra.mxu0 0
        %571 = vmatprep.subr.bf16.mxu0 0
        %572 = vmatpush1.bf16.msra.mxu0 0
        %573 = vmatprep.subr.bf16.mxu0 0
        %574 = vmatpush1.bf16.msra.mxu0 0
        %575 = vmatprep.subr.bf16.mxu0 0
        %576 = vmatpush1.bf16.msra.mxu0 0
        %577 = vmatprep.subr.bf16.mxu0 0
        %578 = vmatpush1.bf16.msra.mxu0 0
        %579 = vmatprep.subr.bf16.mxu0 0
        %580 = vmatpush1.bf16.msra.mxu0 0
        %581 = vmatprep.subr.bf16.mxu0 0
        %582 = vmatpush1.bf16.msra.mxu0 0
        %583 = vmatprep.subr.bf16.mxu0 0
        %584 = vmatpush1.bf16.msra.mxu0 0
        %585 = vmatprep.subr.bf16.mxu0 0
        %586 = vmatpush1.bf16.msra.mxu0 0
        %587 = vmatprep.subr.bf16.mxu0 0
        %588 = vmatpush1.bf16.msra.mxu0 0
        %589 = vmatprep.mubr.bf16.mxu0 0
        %590 = vmatmul.mubr.bf16.gmra.mrb[0].mxu0 %v555
        %v591 = vpop.f32.mrb[0].mxu0
        %v592 = vadd.f32 %v551, %v591
        %v593 = vpop.f32.mrb[0].mxu0
        %v594 = vadd.f32 %v551, %v593
        %v595 = vpop.f32.mrb[0].mxu0
        %v596 = vpop.f32.mrb[0].mxu0
        %597 = vdwg.mxu0
        %v598 = vpack.c.bf16 %v592, %v592
        %v599 = vpack.c.bf16 %v594, %v594
        %v600 = vld [vmem:[#allocation2] sm:$0xf]
        %601 = vxpose.xlu0.c.b16.start [1/8] %v598, 128
        %602 = vxpose.xlu0.c.b16.cont [2/8] 0, 128
        %603 = vxpose.xlu0.c.b16.cont [3/8] 0, 128
        %604 = vxpose.xlu0.c.b16.cont [4/8] 0, 128
        %605 = vxpose.xlu0.c.b16.cont [5/8] 0, 128
        %606 = vxpose.xlu0.c.b16.cont [6/8] 0, 128
        %607 = vxpose.xlu0.c.b16.cont [7/8] 0, 128
        %608 = vxpose.xlu0.c.b16.end [8/8] 0, 128
        %v609 = vpop.trf.xlu0
        %v610 = vpop.trf.xlu0
        %v611 = vpop.trf.xlu0
        %v612 = vpop.trf.xlu0
        %v613 = vpop.trf.xlu0
        %v614 = vpop.trf.xlu0
        %v615 = vpop.trf.xlu0
        %v616 = vpop.trf.xlu0
        %617 = vxpose.xlu0.c.b16.start [1/8] %v599, 128
        %618 = vxpose.xlu0.c.b16.cont [2/8] 0, 128
        %619 = vxpose.xlu0.c.b16.cont [3/8] 0, 128
        %620 = vxpose.xlu0.c.b16.cont [4/8] 0, 128
        %621 = vxpose.xlu0.c.b16.cont [5/8] 0, 128
        %622 = vxpose.xlu0.c.b16.cont [6/8] 0, 128
        %623 = vxpose.xlu0.c.b16.cont [7/8] 0, 128
        %624 = vxpose.xlu0.c.b16.end [8/8] 0, 128
        %v625 = vpop.trf.xlu0
        %v626 = vpop.trf.xlu0
        %v627 = vpop.trf.xlu0
        %v628 = vpop.trf.xlu0
        %v629 = vpop.trf.xlu0
        %v630 = vpop.trf.xlu0
        %v631 = vpop.trf.xlu0
        %v632 = vpop.trf.xlu0
        %v635 = vunpack.c.l.s4 1983009808
        %v636 = vunpack.c.0.s8 %v635
        %v637 = vlaneseq
        %v638 = vshrl.u32 %v637, 7
        %v639 = vsub.s32 %v636, %v638
        %v640 = vrot.slane %v600, %v639
        %v641 = vcombine.high %v640, %v640
        %vm642 = vcmask 31744
        %v644 = vsel %vm642, %v609, 0
        %v647 = vsel %vm642, %v610, 0
        %v650 = vsel %vm642, %v611, 0
        %v653 = vsel %vm642, %v612, 0
        %v656 = vsel %vm642, %v613, 0
        %v659 = vsel %vm642, %v614, 0
        %v662 = vsel %vm642, %v615, 0
        %v665 = vsel %vm642, %v616, 0
        %v668 = vsel %vm642, %v625, 0
        %v671 = vsel %vm642, %v626, 0
        %v674 = vsel %vm642, %v627, 0
        %v677 = vsel %vm642, %v628, 0
        %v680 = vsel %vm642, %v629, 0
        %v683 = vsel %vm642, %v630, 0
        %v686 = vsel %vm642, %v631, 0
        %v689 = vsel %vm642, %v632, 0
        %vm691 = vcmask 1041408
        %v693 = vsel %vm691, %v640, 0
        %v696 = vsel %vm691, %v641, 0
        %698 = vmatprep.subr.bf16.mxu0 %v696
        %699 = vmatpush1.bf16.msra.mxu0 %v693
        %700 = vmatprep.subr.bf16.mxu0 0
        %701 = vmatpush1.bf16.msra.mxu0 0
        %702 = vmatprep.subr.bf16.mxu0 0
        %703 = vmatpush1.bf16.msra.mxu0 0
        %704 = vmatprep.subr.bf16.mxu0 0
        %705 = vmatpush1.bf16.msra.mxu0 0
        %706 = vmatprep.subr.bf16.mxu0 0
        %707 = vmatpush1.bf16.msra.mxu0 0
        %708 = vmatprep.subr.bf16.mxu0 0
        %709 = vmatpush1.bf16.msra.mxu0 0
        %710 = vmatprep.subr.bf16.mxu0 0
        %711 = vmatpush1.bf16.msra.mxu0 0
        %712 = vmatprep.subr.bf16.mxu0 0
        %713 = vmatpush1.bf16.msra.mxu0 0
        %714 = vmatprep.subr.bf16.mxu0 0
        %715 = vmatpush1.bf16.msra.mxu0 0
        %716 = vmatprep.subr.bf16.mxu0 0
        %717 = vmatpush1.bf16.msra.mxu0 0
        %718 = vmatprep.subr.bf16.mxu0 0
        %719 = vmatpush1.bf16.msra.mxu0 0
        %720 = vmatprep.subr.bf16.mxu0 0
        %721 = vmatpush1.bf16.msra.mxu0 0
        %722 = vmatprep.subr.bf16.mxu0 0
        %723 = vmatpush1.bf16.msra.mxu0 0
        %724 = vmatprep.subr.bf16.mxu0 0
        %725 = vmatpush1.bf16.msra.mxu0 0
        %726 = vmatprep.subr.bf16.mxu0 0
        %727 = vmatpush1.bf16.msra.mxu0 0
        %728 = vmatprep.subr.bf16.mxu0 0
        %729 = vmatpush1.bf16.msra.mxu0 0
        %730 = vmatprep.mubr.bf16.mxu0 0
        %731 = vmatmul.mubr.bf16.gmra.mrb[0].mxu0 %v644
        %v732 = vpop.f32.mrb[0].mxu0
        %v733 = vadd.f32 0.0, %v732
        %v734 = vpop.f32.mrb[0].mxu0
        %v735 = vadd.f32 0.0, %v734
        %v736 = vpop.f32.mrb[0].mxu0
        %v737 = vadd.f32 0.0, %v736
        %v738 = vpop.f32.mrb[0].mxu0
        %v739 = vadd.f32 0.0, %v738
        %740 = vmatprep.mubr.bf16.mxu0 0
        %741 = vmatmul.mubr.bf16.gmra.mrb[0].mxu0 %v647
        %v742 = vpop.f32.mrb[0].mxu0
        %v743 = vadd.f32 0.0, %v742
        %v744 = vpop.f32.mrb[0].mxu0
        %v745 = vadd.f32 0.0, %v744
        %v746 = vpop.f32.mrb[0].mxu0
        %v747 = vadd.f32 0.0, %v746
        %v748 = vpop.f32.mrb[0].mxu0
        %v749 = vadd.f32 0.0, %v748
        %750 = vmatprep.mubr.bf16.mxu0 0
        %751 = vmatmul.mubr.bf16.gmra.mrb[0].mxu0 %v650
        %v752 = vpop.f32.mrb[0].mxu0
        %v753 = vadd.f32 0.0, %v752
        %v754 = vpop.f32.mrb[0].mxu0
        %v755 = vadd.f32 0.0, %v754
        %v756 = vpop.f32.mrb[0].mxu0
        %v757 = vadd.f32 0.0, %v756
        %v758 = vpop.f32.mrb[0].mxu0
        %v759 = vadd.f32 0.0, %v758
        %760 = vmatprep.mubr.bf16.mxu0 0
        %761 = vmatmul.mubr.bf16.gmra.mrb[0].mxu0 %v653
        %v762 = vpop.f32.mrb[0].mxu0
        %v763 = vadd.f32 0.0, %v762
        %v764 = vpop.f32.mrb[0].mxu0
        %v765 = vadd.f32 0.0, %v764
        %v766 = vpop.f32.mrb[0].mxu0
        %v767 = vadd.f32 0.0, %v766
        %v768 = vpop.f32.mrb[0].mxu0
        %v769 = vadd.f32 0.0, %v768
        %770 = vmatprep.mubr.bf16.mxu0 0
        %771 = vmatmul.mubr.bf16.gmra.mrb[0].mxu0 %v656
        %v772 = vpop.f32.mrb[0].mxu0
        %v773 = vadd.f32 0.0, %v772
        %v774 = vpop.f32.mrb[0].mxu0
        %v775 = vadd.f32 0.0, %v774
        %v776 = vpop.f32.mrb[0].mxu0
        %v777 = vadd.f32 0.0, %v776
        %v778 = vpop.f32.mrb[0].mxu0
        %v779 = vadd.f32 0.0, %v778
        %780 = vmatprep.mubr.bf16.mxu0 0
        %781 = vmatmul.mubr.bf16.gmra.mrb[0].mxu0 %v659
        %v782 = vpop.f32.mrb[0].mxu0
        %v783 = vadd.f32 0.0, %v782
        %v784 = vpop.f32.mrb[0].mxu0
        %v785 = vadd.f32 0.0, %v784
        %v786 = vpop.f32.mrb[0].mxu0
        %v787 = vadd.f32 0.0, %v786
        %v788 = vpop.f32.mrb[0].mxu0
        %v789 = vadd.f32 0.0, %v788
        %790 = vmatprep.mubr.bf16.mxu0 0
        %791 = vmatmul.mubr.bf16.gmra.mrb[0].mxu0 %v662
        %v792 = vpop.f32.mrb[0].mxu0
        %v793 = vadd.f32 0.0, %v792
        %v794 = vpop.f32.mrb[0].mxu0
        %v795 = vadd.f32 0.0, %v794
        %v796 = vpop.f32.mrb[0].mxu0
        %v797 = vadd.f32 0.0, %v796
        %v798 = vpop.f32.mrb[0].mxu0
        %v799 = vadd.f32 0.0, %v798
        %800 = vmatprep.mubr.bf16.mxu0 0
        %801 = vmatmul.mubr.bf16.gmra.mrb[0].mxu0 %v665
        %v802 = vpop.f32.mrb[0].mxu0
        %v803 = vadd.f32 0.0, %v802
        %v804 = vpop.f32.mrb[0].mxu0
        %v805 = vadd.f32 0.0, %v804
        %v806 = vpop.f32.mrb[0].mxu0
        %v807 = vadd.f32 0.0, %v806
        %v808 = vpop.f32.mrb[0].mxu0
        %v809 = vadd.f32 0.0, %v808
        %810 = vmatprep.mubr.bf16.mxu0 0
        %811 = vmatmul.mubr.bf16.gmra.mrb[0].mxu0 %v668
        %v812 = vpop.f32.mrb[0].mxu0
        %v813 = vadd.f32 0.0, %v812
        %v814 = vpop.f32.mrb[0].mxu0
        %v815 = vadd.f32 0.0, %v814
        %v816 = vpop.f32.mrb[0].mxu0
        %v817 = vadd.f32 0.0, %v816
        %v818 = vpop.f32.mrb[0].mxu0
        %v819 = vadd.f32 0.0, %v818
        %820 = vmatprep.mubr.bf16.mxu0 0
        %821 = vmatmul.mubr.bf16.gmra.mrb[0].mxu0 %v671
        %v822 = vpop.f32.mrb[0].mxu0
        %v823 = vadd.f32 0.0, %v822
        %v824 = vpop.f32.mrb[0].mxu0
        %v825 = vadd.f32 0.0, %v824
        %v826 = vpop.f32.mrb[0].mxu0
        %v827 = vadd.f32 0.0, %v826
        %v828 = vpop.f32.mrb[0].mxu0
        %v829 = vadd.f32 0.0, %v828
        %830 = vmatprep.mubr.bf16.mxu0 0
        %831 = vmatmul.mubr.bf16.gmra.mrb[0].mxu0 %v674
        %v832 = vpop.f32.mrb[0].mxu0
        %v833 = vadd.f32 0.0, %v832
        %v834 = vpop.f32.mrb[0].mxu0
        %v835 = vadd.f32 0.0, %v834
        %v836 = vpop.f32.mrb[0].mxu0
        %v837 = vadd.f32 0.0, %v836
        %v838 = vpop.f32.mrb[0].mxu0
        %v839 = vadd.f32 0.0, %v838
        %840 = vmatprep.mubr.bf16.mxu0 0
        %841 = vmatmul.mubr.bf16.gmra.mrb[0].mxu0 %v677
        %v842 = vpop.f32.mrb[0].mxu0
        %v843 = vadd.f32 0.0, %v842
        %v844 = vpop.f32.mrb[0].mxu0
        %v845 = vadd.f32 0.0, %v844
        %v846 = vpop.f32.mrb[0].mxu0
        %v847 = vadd.f32 0.0, %v846
        %v848 = vpop.f32.mrb[0].mxu0
        %v849 = vadd.f32 0.0, %v848
        %850 = vmatprep.mubr.bf16.mxu0 0
        %851 = vmatmul.mubr.bf16.gmra.mrb[0].mxu0 %v680
        %v852 = vpop.f32.mrb[0].mxu0
        %v853 = vadd.f32 0.0, %v852
        %v854 = vpop.f32.mrb[0].mxu0
        %v855 = vadd.f32 0.0, %v854
        %v856 = vpop.f32.mrb[0].mxu0
        %v857 = vadd.f32 0.0, %v856
        %v858 = vpop.f32.mrb[0].mxu0
        %v859 = vadd.f32 0.0, %v858
        %860 = vmatprep.mubr.bf16.mxu0 0
        %861 = vmatmul.mubr.bf16.gmra.mrb[0].mxu0 %v683
        %v862 = vpop.f32.mrb[0].mxu0
        %v863 = vadd.f32 0.0, %v862
        %v864 = vpop.f32.mrb[0].mxu0
        %v865 = vadd.f32 0.0, %v864
        %v866 = vpop.f32.mrb[0].mxu0
        %v867 = vadd.f32 0.0, %v866
        %v868 = vpop.f32.mrb[0].mxu0
        %v869 = vadd.f32 0.0, %v868
        %870 = vmatprep.mubr.bf16.mxu0 0
        %871 = vmatmul.mubr.bf16.gmra.mrb[0].mxu0 %v686
        %v872 = vpop.f32.mrb[0].mxu0
        %v873 = vadd.f32 0.0, %v872
        %v874 = vpop.f32.mrb[0].mxu0
        %v875 = vadd.f32 0.0, %v874
        %v876 = vpop.f32.mrb[0].mxu0
        %v877 = vadd.f32 0.0, %v876
        %v878 = vpop.f32.mrb[0].mxu0
        %v879 = vadd.f32 0.0, %v878
        %880 = vmatprep.mubr.bf16.mxu0 0
        %881 = vmatmul.mubr.bf16.gmra.mrb[0].mxu0 %v689
        %v882 = vpop.f32.mrb[0].mxu0
        %v883 = vadd.f32 0.0, %v882
        %v884 = vpop.f32.mrb[0].mxu0
        %v885 = vadd.f32 0.0, %v884
        %v886 = vpop.f32.mrb[0].mxu0
        %v887 = vadd.f32 0.0, %v886
        %v888 = vpop.f32.mrb[0].mxu0
        %v889 = vadd.f32 0.0, %v888
        %890 = vdwg.mxu0
        %v891 = vmax.f32 %v733, %v735
        %892 = vmax.xlane.f32.xlu0 %v891
        %v893 = vpop.xlane.xlu0 %892
        %v894 = vmax.f32 %v737, %v739
        %895 = vmax.xlane.f32.xlu0 %v894
        %v896 = vpop.xlane.xlu0 %895
        %v897 = vmax.f32 %v743, %v745
        %898 = vmax.xlane.f32.xlu0 %v897
        %v899 = vpop.xlane.xlu0 %898
        %v900 = vmax.f32 %v747, %v749
        %901 = vmax.xlane.f32.xlu0 %v900
        %v902 = vpop.xlane.xlu0 %901
        %v903 = vmax.f32 %v753, %v755
        %904 = vmax.xlane.f32.xlu0 %v903
        %v905 = vpop.xlane.xlu0 %904
        %v906 = vmax.f32 %v757, %v759
        %907 = vmax.xlane.f32.xlu0 %v906
        %v908 = vpop.xlane.xlu0 %907
        %v909 = vmax.f32 %v763, %v765
        %910 = vmax.xlane.f32.xlu0 %v909
        %v911 = vpop.xlane.xlu0 %910
        %v912 = vmax.f32 %v767, %v769
        %913 = vmax.xlane.f32.xlu0 %v912
        %v914 = vpop.xlane.xlu0 %913
        %v915 = vmax.f32 %v773, %v775
        %916 = vmax.xlane.f32.xlu0 %v915
        %v917 = vpop.xlane.xlu0 %916
        %v918 = vmax.f32 %v777, %v779
        %919 = vmax.xlane.f32.xlu0 %v918
        %v920 = vpop.xlane.xlu0 %919
        %v921 = vmax.f32 %v783, %v785
        %922 = vmax.xlane.f32.xlu0 %v921
        %v923 = vpop.xlane.xlu0 %922
        %v924 = vmax.f32 %v787, %v789
        %925 = vmax.xlane.f32.xlu0 %v924
        %v926 = vpop.xlane.xlu0 %925
        %v927 = vmax.f32 %v793, %v795
        %928 = vmax.xlane.f32.xlu0 %v927
        %v929 = vpop.xlane.xlu0 %928
        %v930 = vmax.f32 %v797, %v799
        %931 = vmax.xlane.f32.xlu0 %v930
        %v932 = vpop.xlane.xlu0 %931
        %v933 = vmax.f32 %v803, %v805
        %934 = vmax.xlane.f32.xlu0 %v933
        %v935 = vpop.xlane.xlu0 %934
        %v936 = vmax.f32 %v807, %v809
        %937 = vmax.xlane.f32.xlu0 %v936
        %v938 = vpop.xlane.xlu0 %937
        %v939 = vmax.f32 %v813, %v815
        %940 = vmax.xlane.f32.xlu0 %v939
        %v941 = vpop.xlane.xlu0 %940
        %v942 = vmax.f32 %v817, %v819
        %943 = vmax.xlane.f32.xlu0 %v942
        %v944 = vpop.xlane.xlu0 %943
        %v945 = vmax.f32 %v823, %v825
        %946 = vmax.xlane.f32.xlu0 %v945
        %v947 = vpop.xlane.xlu0 %946
        %v948 = vmax.f32 %v827, %v829
        %949 = vmax.xlane.f32.xlu0 %v948
        %v950 = vpop.xlane.xlu0 %949
        %v951 = vmax.f32 %v833, %v835
        %952 = vmax.xlane.f32.xlu0 %v951
        %v953 = vpop.xlane.xlu0 %952
        %v954 = vmax.f32 %v837, %v839
        %955 = vmax.xlane.f32.xlu0 %v954
        %v956 = vpop.xlane.xlu0 %955
        %v957 = vmax.f32 %v843, %v845
        %958 = vmax.xlane.f32.xlu0 %v957
        %v959 = vpop.xlane.xlu0 %958
        %v960 = vmax.f32 %v847, %v849
        %961 = vmax.xlane.f32.xlu0 %v960
        %v962 = vpop.xlane.xlu0 %961
        %v963 = vmax.f32 %v853, %v855
        %964 = vmax.xlane.f32.xlu0 %v963
        %v965 = vpop.xlane.xlu0 %964
        %v966 = vmax.f32 %v857, %v859
        %967 = vmax.xlane.f32.xlu0 %v966
        %v968 = vpop.xlane.xlu0 %967
        %v969 = vmax.f32 %v863, %v865
        %970 = vmax.xlane.f32.xlu0 %v969
        %v971 = vpop.xlane.xlu0 %970
        %v972 = vmax.f32 %v867, %v869
        %973 = vmax.xlane.f32.xlu0 %v972
        %v974 = vpop.xlane.xlu0 %973
        %v975 = vmax.f32 %v873, %v875
        %976 = vmax.xlane.f32.xlu0 %v975
        %v977 = vpop.xlane.xlu0 %976
        %v978 = vmax.f32 %v877, %v879
        %979 = vmax.xlane.f32.xlu0 %v978
        %v980 = vpop.xlane.xlu0 %979
        %v981 = vmax.f32 %v883, %v885
        %982 = vmax.xlane.f32.xlu0 %v981
        %v983 = vpop.xlane.xlu0 %982
        %v984 = vmax.f32 %v887, %v889
        %985 = vmax.xlane.f32.xlu0 %v984
        %v986 = vpop.xlane.xlu0 %985
        %v987 = vsub.f32 %v733, %v893
        %v988 = vsub.f32 %v735, %v893
        %v989 = vsub.f32 %v737, %v896
        %v990 = vsub.f32 %v739, %v896
        %v991 = vsub.f32 %v743, %v899
        %v992 = vsub.f32 %v745, %v899
        %v993 = vsub.f32 %v747, %v902
        %v994 = vsub.f32 %v749, %v902
        %v995 = vsub.f32 %v753, %v905
        %v996 = vsub.f32 %v755, %v905
        %v997 = vsub.f32 %v757, %v908
        %v998 = vsub.f32 %v759, %v908
        %v999 = vsub.f32 %v763, %v911
        %v1000 = vsub.f32 %v765, %v911
        %v1001 = vsub.f32 %v767, %v914
        %v1002 = vsub.f32 %v769, %v914
        %v1003 = vsub.f32 %v773, %v917
        %v1004 = vsub.f32 %v775, %v917
        %v1005 = vsub.f32 %v777, %v920
        %v1006 = vsub.f32 %v779, %v920
        %v1007 = vsub.f32 %v783, %v923
        %v1008 = vsub.f32 %v785, %v923
        %v1009 = vsub.f32 %v787, %v926
        %v1010 = vsub.f32 %v789, %v926
        %v1011 = vsub.f32 %v793, %v929
        %v1012 = vsub.f32 %v795, %v929
        %v1013 = vsub.f32 %v797, %v932
        %v1014 = vsub.f32 %v799, %v932
        %v1015 = vsub.f32 %v803, %v935
        %v1016 = vsub.f32 %v805, %v935
        %v1017 = vsub.f32 %v807, %v938
        %v1018 = vsub.f32 %v809, %v938
        %v1019 = vsub.f32 %v813, %v941
        %v1020 = vsub.f32 %v815, %v941
        %v1021 = vsub.f32 %v817, %v944
        %v1022 = vsub.f32 %v819, %v944
        %v1023 = vsub.f32 %v823, %v947
        %v1024 = vsub.f32 %v825, %v947
        %v1025 = vsub.f32 %v827, %v950
        %v1026 = vsub.f32 %v829, %v950
        %v1027 = vsub.f32 %v833, %v953
        %v1028 = vsub.f32 %v835, %v953
        %v1029 = vsub.f32 %v837, %v956
        %v1030 = vsub.f32 %v839, %v956
        %v1031 = vsub.f32 %v843, %v959
        %v1032 = vsub.f32 %v845, %v959
        %v1033 = vsub.f32 %v847, %v962
        %v1034 = vsub.f32 %v849, %v962
        %v1035 = vsub.f32 %v853, %v965
        %v1036 = vsub.f32 %v855, %v965
        %v1037 = vsub.f32 %v857, %v968
        %v1038 = vsub.f32 %v859, %v968
        %v1039 = vsub.f32 %v863, %v971
        %v1040 = vsub.f32 %v865, %v971
        %v1041 = vsub.f32 %v867, %v974
        %v1042 = vsub.f32 %v869, %v974
        %v1043 = vsub.f32 %v873, %v977
        %v1044 = vsub.f32 %v875, %v977
        %v1045 = vsub.f32 %v877, %v980
        %v1046 = vsub.f32 %v879, %v980
        %v1047 = vsub.f32 %v883, %v983
        %v1048 = vsub.f32 %v885, %v983
        %v1049 = vsub.f32 %v887, %v986
        %v1050 = vsub.f32 %v889, %v986
        %v1051 = vmul.f32 %v987, 1.442695
        %v1052 = vpow.pop %v1051
        %v1053 = vmul.f32 %v988, 1.442695
        %v1054 = vpow.pop %v1053
        %v1055 = vmul.f32 %v989, 1.442695
        %v1056 = vpow.pop %v1055
        %v1057 = vmul.f32 %v990, 1.442695
        %v1058 = vpow.pop %v1057
        %v1059 = vmul.f32 %v991, 1.442695
        %v1060 = vpow.pop %v1059
        %v1061 = vmul.f32 %v992, 1.442695
        %v1062 = vpow.pop %v1061
        %v1063 = vmul.f32 %v993, 1.442695
        %v1064 = vpow.pop %v1063
        %v1065 = vmul.f32 %v994, 1.442695
        %v1066 = vpow.pop %v1065
        %v1067 = vmul.f32 %v995, 1.442695
        %v1068 = vpow.pop %v1067
        %v1069 = vmul.f32 %v996, 1.442695
        %v1070 = vpow.pop %v1069
        %v1071 = vmul.f32 %v997, 1.442695
        %v1072 = vpow.pop %v1071
        %v1073 = vmul.f32 %v998, 1.442695
        %v1074 = vpow.pop %v1073
        %v1075 = vmul.f32 %v999, 1.442695
        %v1076 = vpow.pop %v1075
        %v1077 = vmul.f32 %v1000, 1.442695
        %v1078 = vpow.pop %v1077
        %v1079 = vmul.f32 %v1001, 1.442695
        %v1080 = vpow.pop %v1079
        %v1081 = vmul.f32 %v1002, 1.442695
        %v1082 = vpow.pop %v1081
        %v1083 = vmul.f32 %v1003, 1.442695
        %v1084 = vpow.pop %v1083
        %v1085 = vmul.f32 %v1004, 1.442695
        %v1086 = vpow.pop %v1085
        %v1087 = vmul.f32 %v1005, 1.442695
        %v1088 = vpow.pop %v1087
        %v1089 = vmul.f32 %v1006, 1.442695
        %v1090 = vpow.pop %v1089
        %v1091 = vmul.f32 %v1007, 1.442695
        %v1092 = vpow.pop %v1091
        %v1093 = vmul.f32 %v1008, 1.442695
        %v1094 = vpow.pop %v1093
        %v1095 = vmul.f32 %v1009, 1.442695
        %v1096 = vpow.pop %v1095
        %v1097 = vmul.f32 %v1010, 1.442695
        %v1098 = vpow.pop %v1097
        %v1099 = vmul.f32 %v1011, 1.442695
        %v1100 = vpow.pop %v1099
        %v1101 = vmul.f32 %v1012, 1.442695
        %v1102 = vpow.pop %v1101
        %v1103 = vmul.f32 %v1013, 1.442695
        %v1104 = vpow.pop %v1103
        %v1105 = vmul.f32 %v1014, 1.442695
        %v1106 = vpow.pop %v1105
        %v1107 = vmul.f32 %v1015, 1.442695
        %v1108 = vpow.pop %v1107
        %v1109 = vmul.f32 %v1016, 1.442695
        %v1110 = vpow.pop %v1109
        %v1111 = vmul.f32 %v1017, 1.442695
        %v1112 = vpow.pop %v1111
        %v1113 = vmul.f32 %v1018, 1.442695
        %v1114 = vpow.pop %v1113
        %v1115 = vmul.f32 %v1019, 1.442695
        %v1116 = vpow.pop %v1115
        %v1117 = vmul.f32 %v1020, 1.442695
        %v1118 = vpow.pop %v1117
        %v1119 = vmul.f32 %v1021, 1.442695
        %v1120 = vpow.pop %v1119
        %v1121 = vmul.f32 %v1022, 1.442695
        %v1122 = vpow.pop %v1121
        %v1123 = vmul.f32 %v1023, 1.442695
        %v1124 = vpow.pop %v1123
        %v1125 = vmul.f32 %v1024, 1.442695
        %v1126 = vpow.pop %v1125
        %v1127 = vmul.f32 %v1025, 1.442695
        %v1128 = vpow.pop %v1127
        %v1129 = vmul.f32 %v1026, 1.442695
        %v1130 = vpow.pop %v1129
        %v1131 = vmul.f32 %v1027, 1.442695
        %v1132 = vpow.pop %v1131
        %v1133 = vmul.f32 %v1028, 1.442695
        %v1134 = vpow.pop %v1133
        %v1135 = vmul.f32 %v1029, 1.442695
        %v1136 = vpow.pop %v1135
        %v1137 = vmul.f32 %v1030, 1.442695
        %v1138 = vpow.pop %v1137
        %v1139 = vmul.f32 %v1031, 1.442695
        %v1140 = vpow.pop %v1139
        %v1141 = vmul.f32 %v1032, 1.442695
        %v1142 = vpow.pop %v1141
        %v1143 = vmul.f32 %v1033, 1.442695
        %v1144 = vpow.pop %v1143
        %v1145 = vmul.f32 %v1034, 1.442695
        %v1146 = vpow.pop %v1145
        %v1147 = vmul.f32 %v1035, 1.442695
        %v1148 = vpow.pop %v1147
        %v1149 = vmul.f32 %v1036, 1.442695
        %v1150 = vpow.pop %v1149
        %v1151 = vmul.f32 %v1037, 1.442695
        %v1152 = vpow.pop %v1151
        %v1153 = vmul.f32 %v1038, 1.442695
        %v1154 = vpow.pop %v1153
        %v1155 = vmul.f32 %v1039, 1.442695
        %v1156 = vpow.pop %v1155
        %v1157 = vmul.f32 %v1040, 1.442695
        %v1158 = vpow.pop %v1157
        %v1159 = vmul.f32 %v1041, 1.442695
        %v1160 = vpow.pop %v1159
        %v1161 = vmul.f32 %v1042, 1.442695
        %v1162 = vpow.pop %v1161
        %v1163 = vmul.f32 %v1043, 1.442695
        %v1164 = vpow.pop %v1163
        %v1165 = vmul.f32 %v1044, 1.442695
        %v1166 = vpow.pop %v1165
        %v1167 = vmul.f32 %v1045, 1.442695
        %v1168 = vpow.pop %v1167
        %v1169 = vmul.f32 %v1046, 1.442695
        %v1170 = vpow.pop %v1169
        %v1171 = vmul.f32 %v1047, 1.442695
        %v1172 = vpow.pop %v1171
        %v1173 = vmul.f32 %v1048, 1.442695
        %v1174 = vpow.pop %v1173
        %v1175 = vmul.f32 %v1049, 1.442695
        %v1176 = vpow.pop %v1175
        %v1177 = vmul.f32 %v1050, 1.442695
        %v1178 = vpow.pop %v1177
        %v1179 = vpack.c.bf16 %v1056, %v1052
        %v1180 = vpack.c.bf16 %v1058, %v1054
        %v1181 = vpack.c.bf16 %v1064, %v1060
        %v1182 = vpack.c.bf16 %v1066, %v1062
        %v1183 = vpack.c.bf16 %v1072, %v1068
        %v1184 = vpack.c.bf16 %v1074, %v1070
        %v1185 = vpack.c.bf16 %v1080, %v1076
        %v1186 = vpack.c.bf16 %v1082, %v1078
        %v1187 = vpack.c.bf16 %v1088, %v1084
        %v1188 = vpack.c.bf16 %v1090, %v1086
        %v1189 = vpack.c.bf16 %v1096, %v1092
        %v1190 = vpack.c.bf16 %v1098, %v1094
        %v1191 = vpack.c.bf16 %v1104, %v1100
        %v1192 = vpack.c.bf16 %v1106, %v1102
        %v1193 = vpack.c.bf16 %v1112, %v1108
        %v1194 = vpack.c.bf16 %v1114, %v1110
        %v1195 = vpack.c.bf16 %v1120, %v1116
        %v1196 = vpack.c.bf16 %v1122, %v1118
        %v1197 = vpack.c.bf16 %v1128, %v1124
        %v1198 = vpack.c.bf16 %v1130, %v1126
        %v1199 = vpack.c.bf16 %v1136, %v1132
        %v1200 = vpack.c.bf16 %v1138, %v1134
        %v1201 = vpack.c.bf16 %v1144, %v1140
        %v1202 = vpack.c.bf16 %v1146, %v1142
        %v1203 = vpack.c.bf16 %v1152, %v1148
        %v1204 = vpack.c.bf16 %v1154, %v1150
        %v1205 = vpack.c.bf16 %v1160, %v1156
        %v1206 = vpack.c.bf16 %v1162, %v1158
        %v1207 = vpack.c.bf16 %v1168, %v1164
        %v1208 = vpack.c.bf16 %v1170, %v1166
        %v1209 = vpack.c.bf16 %v1176, %v1172
        %v1210 = vpack.c.bf16 %v1178, %v1174
        %1211 = vmatprep.subr.bf16.mxu0 %v1180
        %1212 = vmatpush1.bf16.xpose.msra.mxu0 %v1179
        %1213 = vmatprep.subr.bf16.mxu0 %v1182
        %1214 = vmatpush1.bf16.xpose.msra.mxu0 %v1181
        %1215 = vmatprep.subr.bf16.mxu0 %v1184
        %1216 = vmatpush1.bf16.xpose.msra.mxu0 %v1183
        %1217 = vmatprep.subr.bf16.mxu0 %v1186
        %1218 = vmatpush1.bf16.xpose.msra.mxu0 %v1185
        %1219 = vmatprep.subr.bf16.mxu0 %v1188
        %1220 = vmatpush1.bf16.xpose.msra.mxu0 %v1187
        %1221 = vmatprep.subr.bf16.mxu0 %v1190
        %1222 = vmatpush1.bf16.xpose.msra.mxu0 %v1189
        %1223 = vmatprep.subr.bf16.mxu0 %v1192
        %1224 = vmatpush1.bf16.xpose.msra.mxu0 %v1191
        %1225 = vmatprep.subr.bf16.mxu0 %v1194
        %1226 = vmatpush1.bf16.xpose.msra.mxu0 %v1193
        %1227 = vmatprep.subr.bf16.mxu0 %v1196
        %1228 = vmatpush1.bf16.xpose.msra.mxu0 %v1195
        %1229 = vmatprep.subr.bf16.mxu0 %v1198
        %1230 = vmatpush1.bf16.xpose.msra.mxu0 %v1197
        %1231 = vmatprep.subr.bf16.mxu0 %v1200
        %1232 = vmatpush1.bf16.xpose.msra.mxu0 %v1199
        %1233 = vmatprep.subr.bf16.mxu0 %v1202
        %1234 = vmatpush1.bf16.xpose.msra.mxu0 %v1201
        %1235 = vmatprep.subr.bf16.mxu0 %v1204
        %1236 = vmatpush1.bf16.xpose.msra.mxu0 %v1203
        %1237 = vmatprep.subr.bf16.mxu0 %v1206
        %1238 = vmatpush1.bf16.xpose.msra.mxu0 %v1205
        %1239 = vmatprep.subr.bf16.mxu0 %v1208
        %1240 = vmatpush1.bf16.xpose.msra.mxu0 %v1207
        %1241 = vmatprep.subr.bf16.mxu0 %v1210
        %1242 = vmatpush1.bf16.xpose.msra.mxu0 %v1209
        %1243 = vmatprep.mubr.bf16.mxu0 1065369472
        %1244 = vmatmul.mubr.bf16.gmra.mrb[0].mxu0 1065369472
        %v1245 = vpop.f32.mrb[0].mxu0
        %v1246 = vadd.f32 0.0, %v1245
        %v1247 = vpop.f32.mrb[0].mxu0
        %v1248 = vadd.f32 0.0, %v1247
        %v1249 = vpop.f32.mrb[0].mxu0
        %v1250 = vpop.f32.mrb[0].mxu0
        %1251 = vdwg.mxu0
        %v1252 = vld [vmem:[#allocation3] sm:$0xff]
        %v1253 = vld [vmem:[#allocation3 + $0x8] sm:$0xff]
        %v1254 = vld [vmem:[#allocation3 + $0x10] sm:$0xff]
        %v1255 = vld [vmem:[#allocation3 + $0x18] sm:$0xff]
        %1256 = vmatprep.subr.bf16.mxu0 %v1180
        %1257 = vmatpush1.bf16.xpose.msra.mxu0 %v1179
        %1258 = vmatprep.subr.bf16.mxu0 %v1182
        %1259 = vmatpush1.bf16.xpose.msra.mxu0 %v1181
        %1260 = vmatprep.subr.bf16.mxu0 %v1184
        %1261 = vmatpush1.bf16.xpose.msra.mxu0 %v1183
        %1262 = vmatprep.subr.bf16.mxu0 %v1186
        %1263 = vmatpush1.bf16.xpose.msra.mxu0 %v1185
        %1264 = vmatprep.subr.bf16.mxu0 %v1188
        %1265 = vmatpush1.bf16.xpose.msra.mxu0 %v1187
        %1266 = vmatprep.subr.bf16.mxu0 %v1190
        %1267 = vmatpush1.bf16.xpose.msra.mxu0 %v1189
        %1268 = vmatprep.subr.bf16.mxu0 %v1192
        %1269 = vmatpush1.bf16.xpose.msra.mxu0 %v1191
        %1270 = vmatprep.subr.bf16.mxu0 %v1194
        %1271 = vmatpush1.bf16.xpose.msra.mxu0 %v1193
        %1272 = vmatprep.subr.bf16.mxu0 %v1196
        %1273 = vmatpush1.bf16.xpose.msra.mxu0 %v1195
        %1274 = vmatprep.subr.bf16.mxu0 %v1198
        %1275 = vmatpush1.bf16.xpose.msra.mxu0 %v1197
        %1276 = vmatprep.subr.bf16.mxu0 %v1200
        %1277 = vmatpush1.bf16.xpose.msra.mxu0 %v1199
        %1278 = vmatprep.subr.bf16.mxu0 %v1202
        %1279 = vmatpush1.bf16.xpose.msra.mxu0 %v1201
        %1280 = vmatprep.subr.bf16.mxu0 %v1204
        %1281 = vmatpush1.bf16.xpose.msra.mxu0 %v1203
        %1282 = vmatprep.subr.bf16.mxu0 %v1206
        %1283 = vmatpush1.bf16.xpose.msra.mxu0 %v1205
        %1284 = vmatprep.subr.bf16.mxu0 %v1208
        %1285 = vmatpush1.bf16.xpose.msra.mxu0 %v1207
        %1286 = vmatprep.subr.bf16.mxu0 %v1210
        %1287 = vmatpush1.bf16.xpose.msra.mxu0 %v1209
        %1288 = vmatprep.mubr.bf16.mxu0 %v1253
        %1289 = vmatmul.mubr.bf16.gmra.mrb[0].mxu0 %v1252
        %v1290 = vpop.f32.mrb[0].mxu0
        %v1291 = vadd.f32 0.0, %v1290
        %v1292 = vpop.f32.mrb[0].mxu0
        %v1293 = vadd.f32 0.0, %v1292
        %v1294 = vpop.f32.mrb[0].mxu0
        %v1295 = vadd.f32 0.0, %v1294
        %v1296 = vpop.f32.mrb[0].mxu0
        %v1297 = vadd.f32 0.0, %v1296
        %1298 = vmatprep.mubr.bf16.mxu0 %v1255
        %1299 = vmatmul.mubr.bf16.gmra.mrb[0].mxu0 %v1254
        %v1300 = vpop.f32.mrb[0].mxu0
        %v1301 = vadd.f32 0.0, %v1300
        %v1302 = vpop.f32.mrb[0].mxu0
        %v1303 = vadd.f32 0.0, %v1302
        %v1304 = vpop.f32.mrb[0].mxu0
        %v1305 = vadd.f32 0.0, %v1304
        %v1306 = vpop.f32.mrb[0].mxu0
        %v1307 = vadd.f32 0.0, %v1306
        %1308 = vdwg.mxu0
        %v1309 = vrcp.pop %v1246
        %v1310 = vrcp.pop %v1248
        %s1311 = sld [smem:[#allocation4]]
        %v1312 = vlaneseq
        %v1313 = vshrl.u32 %v1312, 7
        %v1314 = vsub.s32 0, %v1313
        %v1315 = vrot.slane %v1309, %v1314
        %v1316 = vlaneseq
        %v1317 = vshrl.u32 %v1316, 7
        %v1318 = vsub.s32 0, %v1317
        %v1319 = vrot.slane %v1310, %v1318
        %v1320 = vmul.f32 %v1291, %v1315
        %v1321 = vmul.f32 %v1293, %v1319
        %v1322 = vmul.f32 %v1295, %v1315
        %v1323 = vmul.f32 %v1297, %v1319
        %v1324 = vmul.f32 %v1301, %v1315
        %v1325 = vmul.f32 %v1303, %v1319
        %v1326 = vmul.f32 %v1305, %v1315
        %v1327 = vmul.f32 %v1307, %v1319
        %v1328 = vstv %s1311
        %v1329 = vmul.f32 %v1328, %v1320
        %v1330 = vmul.f32 %v1328, %v1321
        %v1331 = vmul.f32 %v1328, %v1322
        %v1332 = vmul.f32 %v1328, %v1323
        %v1333 = vmul.f32 %v1328, %v1324
        %v1334 = vmul.f32 %v1328, %v1325
        %v1335 = vmul.f32 %v1328, %v1326
        %v1336 = vmul.f32 %v1328, %v1327
        %v1337 = vadd.f32 %v1329, %v534
        %v1338 = vadd.f32 %v1330, %v535
        %v1339 = vadd.f32 %v1331, %v536
        %v1340 = vadd.f32 %v1332, %v537
        %v1341 = vadd.f32 %v1333, %v538
        %v1342 = vadd.f32 %v1334, %v539
        %v1343 = vadd.f32 %v1335, %v540
        %v1344 = vadd.f32 %v1336, %v541
        %1345 = vst [vmem:[%s338] sm:$0xff] %v1337
        %1346 = vst [vmem:[%s338 + $0x8] sm:$0xff] %v1338
        %1347 = vst [vmem:[%s338 + $0x10] sm:$0xff] %v1339
        %1348 = vst [vmem:[%s338 + $0x18] sm:$0xff] %v1340
        %1349 = vst [vmem:[%s338 + $0x20] sm:$0xff] %v1341
        %1350 = vst [vmem:[%s338 + $0x28] sm:$0xff] %v1342
        %1351 = vst [vmem:[%s338 + $0x30] sm:$0xff] %v1343
        %1352 = vst [vmem:[%s338 + $0x38] sm:$0xff] %v1344
        %s1353 = sand.u32 %s221, 1
        %s1354 = scalar_lea.sflag [#allocation7], %s1353
        %s1355 = sand.u32 %s221, 1
        %s1356 = smul.addr %s1355, 64
        %s1357 = scalar_lea.vmem [#allocation8], %s1356
        // Predicated region
        $region61: #{tpu_custom_call.1} parent=51 // pred_check
          %p1358 = pneg %p231
        $region62: #{tpu_custom_call.1} parent=51 // pred_check_branch
          %1360 = sbr.rel (%p1358) target = $region64
        $region63: #{tpu_custom_call.1} parent=51 // pred_region
          %s1361 = smul.u32 2, %s31
          %s1363 = ssub.s32 1024, 1024
          %1364 = vsyncadd %s1354, %s1363
          %s1365 = smul.addr %s30, 8
          %s1366 = sadd.s32 %s1361, %s1365
          %s1367 = smul.addr %s1366, 128
          %s1368 = scalar_lea.hbm %s8, %s1367
          %s1369 = sshll.u32 %s1357, 4
          %s1370 = int_to_ptr.vmem [resolvable:$true] %s1369
          %1375 = dma.vmem_to_hbm [thread:$0]  %s1370, 1024, %s1368, %s1354, 256, 256, 16
        $region64: #{tpu_custom_call.1} parent=51 // pred_fallthru
          _
      $region52: #{tpu_custom_call.1} parent=5 // pred_fallthru
        _
      %p1376 = scmp.le.s32.totalorder 2, %s21
      // Predicated region
      $region65: #{tpu_custom_call.1} parent=5 // pred_check
        %p1377 = pneg %p1376
      $region66: #{tpu_custom_call.1} parent=5 // pred_check_branch
        %1379 = sbr.rel (%p1377) target = $region68
      $region67: #{tpu_custom_call.1} parent=5 // pred_region
        %s1380 = ssub.s32 %s21, 2
        // Predicated region
        $region69: #{tpu_custom_call.1} parent=67 // pred_check
          %p1381 = pneg %p237
        $region70: #{tpu_custom_call.1} parent=67 // pred_check_branch
          %1383 = sbr.rel (%p1381) target = $region72
        $region71: #{tpu_custom_call.1} parent=67 // pred_region
          %s1384 = sand.u32 %s222, 1
          %s1385 = scalar_lea.sflag [#allocation7], %s1384
          %s1386 = sand.u32 %s222, 1
          %s1387 = smul.addr %s1386, 64
          %s1388 = scalar_lea.vmem [#allocation8], %s1387
          %1389 = dma.done %s1385, 1024
        $region72: #{tpu_custom_call.1} parent=67 // pred_fallthru
          _
      $region68: #{tpu_custom_call.1} parent=5 // pred_fallthru
        _
    $region6: #{tpu_custom_call.1} parent=1 // loop_footer
      %s25 = sadd.s32 1, %s21
    $region7: #{tpu_custom_call.1} parent=1 // loop_footer_branch
      %20 = sbr.rel target = $region3
    $region8: #{tpu_custom_call.1} parent=1 // loop_exit
      _
    %1390 = vsyncpa [#allocation6], 1
    %s1391 = scalar_lea.sflag [#allocation6], 1
    %1392 = vsyncpa %s1391, 1
    %1393 = vsyncpa [#allocation7], 1
    %s1394 = scalar_lea.sflag [#allocation7], 1
    %1395 = vsyncpa %s1394, 1

</llo_original>
